<compile_context>
chip_gen: v6e
topology: v6e:2x2x1
jax: 0.10.0
libtpu: 0.0.40
codegen_flags: <defaults>
</compile_context>

<pallas_src>
import math

import jax
import jax.numpy as jnp
from jax import lax
from jax.experimental import pallas as pl
from jax.experimental.pallas import tpu as pltpu

EPS = 1e-12
_ONE_M2EPS = 1.0 - 2.0 * EPS
_F32_BIG = 3.0e38  # clamp u^(v+1) before approx-reciprocal Newton (avoid inf*0=NaN)


def _cal_gamma(v):
    # gamma((v+1)/2) / (sqrt(v*pi) * gamma(v/2)); lgamma for numeric stability
    return math.exp(math.lgamma((v + 1.0) / 2.0) - math.lgamma(v / 2.0)) / math.sqrt(
        v * math.pi
    )


def _make_pow_fn(v, c):
    """Returns f(dr) = c * (1 + dr/v) ** (-(v+1)) for elementwise dr >= 0.

    Integral v  -> exponentiation-by-squaring (VPU) + approx reciprocal (EUP)
                   + one Newton refinement step.
    Otherwise   -> exp/log1p fallback (exact semantics, heavier on the EUP).
    """
    v = float(v)
    invv = 1.0 / v
    vi = int(round(v))
    if abs(v - vi) < 1e-9 and 1 <= vi <= 4096:
        e = vi + 1

        def f(dr):
            u = 1.0 + dr * invv                 # u >= 1, finite
            acc = None
            base = u
            ee = e
            while ee > 0:                        # trace-time unrolled squaring
                if ee & 1:
                    acc = base if acc is None else acc * base
                ee >>= 1
                if ee:
                    base = base * base
            up = jnp.minimum(acc, _F32_BIG)      # keep Newton step NaN-free
            r = pl.reciprocal(up, approx=True)   # cheap EUP vrcp
            r = r * (2.0 - up * r)               # one Newton step (~1e-7 rel err)
            return c * r

        return f

    nvp1 = -(v + 1.0)

    def f(dr):
        return c * jnp.exp(nvp1 * jnp.log1p(dr * invv))

    return f


def _make_kernel(n, tm, tn, d_lat, has_pad, pow_in, pow_lat):
    use_vpu_latent_gram = d_lat <= 4

    def kernel(xi_ref, xjt_ref, zi_ref, zjt_ref,
               xsqr_ref, xsqc_ref, zsqr_ref, zsqc_ref,
               rhoc_ref, rhor_ref, isigc_ref, isigr_ref, o_ref):
        i = pl.program_id(0)
        j = pl.program_id(1)

        @pl.when(j == 0)
        def _():
            o_ref[...] = jnp.zeros_like(o_ref)

        # ---- pairwise squared distances, input space (row norms precomputed) -
        gram = jnp.dot(xi_ref[...], xjt_ref[...],
                       preferred_element_type=jnp.float32)
        dist = jnp.maximum(xsqr_ref[...] + xsqc_ref[...] - 2.0 * gram, 1e-12)

        # ---- pairwise squared distances, latent space --------------------------
        if use_vpu_latent_gram:
            zi = zi_ref[...]
            zjt = zjt_ref[...]
            gram_z = zi[:, 0:1] * zjt[0:1, :]
            for d in range(1, d_lat):
                gram_z = gram_z + zi[:, d:d + 1] * zjt[d:d + 1, :]
        else:
            gram_z = jnp.dot(zi_ref[...], zjt_ref[...],
                             preferred_element_type=jnp.float32)
        dist_z = jnp.maximum(zsqr_ref[...] + zsqc_ref[...] - 2.0 * gram_z, 1e-12)

        # ---- P = Pij + Pij.T - Pij*Pij.T (transpose via row-broadcast rho/sig) -
        dr_c = jnp.maximum((dist - rhoc_ref[...]) * isigc_ref[...], 0.0)
        dr_r = jnp.maximum((dist - rhor_ref[...]) * isigr_ref[...], 0.0)
        p_c = pow_in(dr_c)
        p_r = pow_in(dr_r)
        P = p_c + p_r - p_c * p_r

        # ---- Q: rho=0, sigma=1 -> q already symmetric ---------------------------
        q = pow_lat(dist_z)
        Q = q + q - q * q

        # ---- two-way divergence ------------------------------------------------
        P_ = P * _ONE_M2EPS + EPS
        Q_ = Q * _ONE_M2EPS + EPS
        t = P_ * jnp.log(Q_ + EPS) + (1.0 - P_) * jnp.log(1.0 - Q_ + EPS)

        # ---- reduction: mask only on tiles touching the diagonal / padding ------
        row_lo = i * tm
        col_lo = j * tn
        needs_mask = (row_lo < col_lo + tn) & (col_lo < row_lo + tm)
        if has_pad:
            needs_mask = needs_mask | (row_lo + tm > n) | (col_lo + tn > n)

        @pl.when(needs_mask)
        def _():
            gr = row_lo + lax.broadcasted_iota(jnp.int32, (tm, tn), 0)
            gc = col_lo + lax.broadcasted_iota(jnp.int32, (tm, tn), 1)
            valid = gr != gc
            if has_pad:
                valid = valid & (gr < n) & (gc < n)
            part = jnp.sum(jnp.where(valid, t, 0.0), axis=0, keepdims=True)
            o_ref[...] = o_ref[...] + part.reshape(1, 1, tn)

        @pl.when(jnp.logical_not(needs_mask))
        def _():
            part = jnp.sum(t, axis=0, keepdims=True)   # sublane reduce only
            o_ref[...] = o_ref[...] + part.reshape(1, 1, tn)

    return kernel


def dmt_source_loss(input_data, latent_data, rho, sigma,
                    v_input=100.0, v_latent=100.0):
    f32 = jnp.float32
    x = jnp.asarray(input_data, f32)
    z = jnp.asarray(latent_data, f32)
    n, d_in = x.shape
    d_lat = z.shape[1]

    # tm=128 keeps grid_m >= 2 for v7x megacore whenever N > 128 and keeps the
    # elementwise working set small (v5e).  tn lane-dense multiple of 128.
    tm = 128
    tn = 256 if n > 128 else 128
    n_pad = ((n + tn - 1) // tn) * tn          # divisible by both tm and tn
    grid_m = n_pad // tm
    grid_n = n_pad // tn
    has_pad = n_pad != n
    pad_n = n_pad - n

    x_p = jnp.pad(x, ((0, pad_n), (0, 0)))
    z_p = jnp.pad(z, ((0, pad_n), (0, 0)))
    xt_p = x_p.T                                # lane-dense column blocks
    zt_p = z_p.T

    # Precomputed row norms and reciprocal sigma (streamed as tiny slices).
    xsq = jnp.sum(x_p * x_p, axis=1)
    zsq = jnp.sum(z_p * z_p, axis=1)
    rho_v = jnp.pad(jnp.reshape(jnp.asarray(rho, f32), (-1,)), (0, pad_n))
    sig_v = jnp.pad(jnp.reshape(jnp.asarray(sigma, f32), (-1,)), (0, pad_n),
                    constant_values=1.0)
    isig_v = 1.0 / sig_v

    xsq_r = xsq.reshape(n_pad, 1)
    xsq_c = xsq.reshape(1, n_pad)
    zsq_r = zsq.reshape(n_pad, 1)
    zsq_c = zsq.reshape(1, n_pad)
    rho_r = rho_v.reshape(n_pad, 1)
    rho_c = rho_v.reshape(1, n_pad)
    isig_r = isig_v.reshape(n_pad, 1)
    isig_c = isig_v.reshape(1, n_pad)

    v_in = float(v_input)
    v_lat = float(v_latent)
    g_in = _cal_gamma(v_in)
    g_lat = _cal_gamma(v_lat)
    # NOTE: 2 * 3.14 (not 2*pi) is intentional -- faithful to the torch source.
    c_in = g_in * g_in * 2.0 * 3.14
    c_lat = g_lat * g_lat * 2.0 * 3.14

    kernel = _make_kernel(n, tm, tn, d_lat, has_pad,
                          _make_pow_fn(v_in, c_in), _make_pow_fn(v_lat, c_lat))

    partials = pl.pallas_call(
        kernel,
        out_shape=jax.ShapeDtypeStruct((grid_m, 1, tn), f32),
        grid_spec=pltpu.PrefetchScalarGridSpec(
            num_scalar_prefetch=0,
            grid=(grid_m, grid_n),
            in_specs=[
                pl.BlockSpec((tm, d_in), lambda i, j: (i, 0)),    # x row block
                pl.BlockSpec((d_in, tn), lambda i, j: (0, j)),    # x^T col block
                pl.BlockSpec((tm, d_lat), lambda i, j: (i, 0)),   # z row block
                pl.BlockSpec((d_lat, tn), lambda i, j: (0, j)),   # z^T col block
                pl.BlockSpec((tm, 1), lambda i, j: (i, 0)),       # ||x||^2 rows
                pl.BlockSpec((1, tn), lambda i, j: (0, j)),       # ||x||^2 cols
                pl.BlockSpec((tm, 1), lambda i, j: (i, 0)),       # ||z||^2 rows
                pl.BlockSpec((1, tn), lambda i, j: (0, j)),       # ||z||^2 cols
                pl.BlockSpec((1, tn), lambda i, j: (0, j)),       # rho cols
                pl.BlockSpec((tm, 1), lambda i, j: (i, 0)),       # rho rows
                pl.BlockSpec((1, tn), lambda i, j: (0, j)),       # 1/sigma cols
                pl.BlockSpec((tm, 1), lambda i, j: (i, 0)),       # 1/sigma rows
            ],
            out_specs=pl.BlockSpec((1, 1, tn), lambda i, j: (i, 0, 0)),
        ),
        compiler_params=pltpu.CompilerParams(
            dimension_semantics=("parallel", "arbitrary")),
    )(x_p, xt_p, z_p, zt_p, xsq_r, xsq_c, zsq_r, zsq_c,
      rho_c, rho_r, isig_c, isig_r)

    cnt = jnp.float32(n * (n - 1))
    return -(jnp.sum(partials) / cnt)


def _reference_loss(x, z, rho, sigma, v_in, v_lat):
    # pure-JAX reference mirroring the torch module (sanity check only)
    def dist_sq(a):
        sq = jnp.sum(a * a, axis=1, keepdims=True)
        d = sq + sq.T - 2.0 * (a @ a.T)
        return jnp.maximum(d, 1e-12)

    def sim(dist, rho_, sigma_, gamma, v):
        dr = jnp.maximum((dist - rho_) / sigma_, 0.0)
        pij = gamma * gamma * (1.0 + dr / v) ** (-(v + 1.0)) * 2.0 * 3.14
        return pij + pij.T - pij * pij.T

    n = x.shape[0]
    P = sim(dist_sq(x), rho[None, :], sigma[None, :], _cal_gamma(v_in), v_in)
    Q = sim(dist_sq(z), 0.0, 1.0, _cal_gamma(v_lat), v_lat)
    off = ~jnp.eye(n, dtype=bool)
    P_ = P * _ONE_M2EPS + EPS
    Q_ = Q * _ONE_M2EPS + EPS
    t = P_ * jnp.log(Q_ + EPS) + (1.0 - P_) * jnp.log(1.0 - Q_ + EPS)
    return -(jnp.sum(jnp.where(off, t, 0.0)) / (n * (n - 1)))


if __name__ == "__main__":
    key = jax.random.PRNGKey(0)
    k1, k2, k3, k4 = jax.random.split(key, 4)

    N, D_IN, D_LAT = 32, 16, 2
    x = jax.random.normal(k1, (N, D_IN), dtype=jnp.float32)      # input_data
    z = jax.random.normal(k2, (N, D_LAT), dtype=jnp.float32)     # latent_data
    rho = 0.1 * jax.random.uniform(k3, (N,), dtype=jnp.float32)
    sigma = 1.0 + 0.1 * jax.random.uniform(k4, (N,), dtype=jnp.float32)

    loss = dmt_source_loss(x, z, rho, sigma, v_input=100.0, v_latent=100.0)
    jax.block_until_ready(loss)

    ref = _reference_loss(x, z, rho, sigma, 100.0, 100.0)
    assert jnp.isfinite(loss), "loss is not finite"
    assert abs(float(loss) - float(ref)) <= 1e-3 + 2e-3 * abs(float(ref)), (
        float(loss), float(ref))

    # TODO(synk): the torch module's interactive `input('stop and find nan')`
    # NaN guard has no kernel equivalent; finiteness is asserted host-side.
    print("KERNEL_OK")
</pallas_src>

<mosaic_0001>
module attributes {stable_mosaic.version = 11 : i64} {
  func.func @kernel(%arg0: i32, %arg1: i32, %arg2: memref<128x16xf32, #tpu.memory_space<vmem>>, %arg3: memref<16x128xf32, #tpu.memory_space<vmem>>, %arg4: memref<128x2xf32, #tpu.memory_space<vmem>>, %arg5: memref<2x128xf32, #tpu.memory_space<vmem>>, %arg6: memref<128x1xf32, #tpu.memory_space<vmem>>, %arg7: memref<1x128xf32, #tpu.memory_space<vmem>>, %arg8: memref<128x1xf32, #tpu.memory_space<vmem>>, %arg9: memref<1x128xf32, #tpu.memory_space<vmem>>, %arg10: memref<1x128xf32, #tpu.memory_space<vmem>>, %arg11: memref<128x1xf32, #tpu.memory_space<vmem>>, %arg12: memref<1x128xf32, #tpu.memory_space<vmem>>, %arg13: memref<128x1xf32, #tpu.memory_space<vmem>>, %arg14: memref<1x1x128xf32, #tpu.memory_space<vmem>>) attributes {dimension_semantics = [#tpu.dimension_semantics<parallel>, #tpu.dimension_semantics<arbitrary>], iteration_bounds = array<i64: 1, 1>, scalar_prefetch = 0 : i64, scratch_operands = 0 : i64, tpu.core_type = #tpu.core_type<tc>, window_params = [{transform_indices = @transform_0, window_bounds = array<i64: 128, 16>}, {transform_indices = @transform_1, window_bounds = array<i64: 16, 128>}, {transform_indices = @transform_2, window_bounds = array<i64: 128, 2>}, {transform_indices = @transform_3, window_bounds = array<i64: 2, 128>}, {transform_indices = @transform_4, window_bounds = array<i64: 128, 1>}, {transform_indices = @transform_5, window_bounds = array<i64: 1, 128>}, {transform_indices = @transform_6, window_bounds = array<i64: 128, 1>}, {transform_indices = @transform_7, window_bounds = array<i64: 1, 128>}, {transform_indices = @transform_8, window_bounds = array<i64: 1, 128>}, {transform_indices = @transform_9, window_bounds = array<i64: 128, 1>}, {transform_indices = @transform_10, window_bounds = array<i64: 1, 128>}, {transform_indices = @transform_11, window_bounds = array<i64: 128, 1>}, {transform_indices = @transform_12, window_bounds = array<i64: 1, 1, 128>}]} {
    %c0_i32 = arith.constant 0 : i32
    %0 = arith.cmpi eq, %arg1, %c0_i32 : i32
    %1 = arith.extui %0 : i1 to i32
    %c0_i32_0 = arith.constant 0 : i32
    %2 = arith.cmpi ne, %1, %c0_i32_0 : i32
    scf.if %2 {
      %cst_61 = arith.constant 0.000000e+00 : f32
      %166 = vector.broadcast %cst_61 : f32 to vector<1x1x128xf32>
      %c0_62 = arith.constant 0 : index
      %c0_63 = arith.constant 0 : index
      %c0_64 = arith.constant 0 : index
      %167 = vector.load %arg14[%c0_62, %c0_63, %c0_64] : memref<1x1x128xf32, #tpu.memory_space<vmem>>, vector<1x1x128xf32>
      tpu.vector_store %arg14[%c0_62, %c0_63, %c0_64], %166 {strides = array<i32>} : memref<1x1x128xf32, #tpu.memory_space<vmem>>, vector<1x1x128xf32>,
    } else {
    }
    %c0 = arith.constant 0 : index
    %c0_1 = arith.constant 0 : index
    %3 = vector.load %arg2[%c0, %c0_1] : memref<128x16xf32, #tpu.memory_space<vmem>>, vector<128x16xf32>
    %c0_2 = arith.constant 0 : index
    %c0_3 = arith.constant 0 : index
    %4 = vector.load %arg3[%c0_2, %c0_3] : memref<16x128xf32, #tpu.memory_space<vmem>>, vector<16x128xf32>
    %cst = arith.constant dense<0.000000e+00> : vector<128x128xf32>
    %5 = tpu.matmul %3, %4, %cst {dimension_numbers = #tpu.dot_dimension_numbers<[1], [0], [0], [1], [0, 0, 1, 1], [], []>} : vector<128x16xf32>, vector<16x128xf32>, vector<128x128xf32> -> vector<128x128xf32>
    %c0_4 = arith.constant 0 : index
    %c0_5 = arith.constant 0 : index
    %6 = vector.load %arg6[%c0_4, %c0_5] : memref<128x1xf32, #tpu.memory_space<vmem>>, vector<128x1xf32>
    %c0_6 = arith.constant 0 : index
    %c0_7 = arith.constant 0 : index
    %7 = vector.load %arg7[%c0_6, %c0_7] : memref<1x128xf32, #tpu.memory_space<vmem>>, vector<1x128xf32>
    %8 = vector.broadcast %6 : vector<128x1xf32> to vector<128x128xf32>
    %9 = vector.broadcast %7 : vector<1x128xf32> to vector<128x128xf32>
    %10 = arith.addf %8, %9 : vector<128x128xf32>
    %cst_8 = arith.constant 2.000000e+00 : f32
    %11 = vector.broadcast %cst_8 : f32 to vector<128x128xf32>
    %12 = arith.mulf %11, %5 : vector<128x128xf32>
    %13 = arith.subf %10, %12 : vector<128x128xf32>
    %cst_9 = arith.constant 9.99999996E-13 : f32
    %14 = vector.broadcast %cst_9 : f32 to vector<128x128xf32>
    %15 = arith.maximumf %13, %14 : vector<128x128xf32>
    %c0_10 = arith.constant 0 : index
    %c0_11 = arith.constant 0 : index
    %16 = vector.load %arg4[%c0_10, %c0_11] : memref<128x2xf32, #tpu.memory_space<vmem>>, vector<128x2xf32>
    %c0_12 = arith.constant 0 : index
    %c0_13 = arith.constant 0 : index
    %17 = vector.load %arg5[%c0_12, %c0_13] : memref<2x128xf32, #tpu.memory_space<vmem>>, vector<2x128xf32>
    %18 = vector.extract_strided_slice %16 {offsets = [0, 0], sizes = [128, 1], strides = [1, 1]} : vector<128x2xf32> to vector<128x1xf32>
    %19 = vector.extract_strided_slice %17 {offsets = [0, 0], sizes = [1, 128], strides = [1, 1]} : vector<2x128xf32> to vector<1x128xf32>
    %20 = vector.broadcast %18 : vector<128x1xf32> to vector<128x128xf32>
    %21 = vector.broadcast %19 : vector<1x128xf32> to vector<128x128xf32>
    %22 = arith.mulf %20, %21 : vector<128x128xf32>
    %23 = vector.extract_strided_slice %16 {offsets = [0, 1], sizes = [128, 1], strides = [1, 1]} : vector<128x2xf32> to vector<128x1xf32>
    %24 = vector.extract_strided_slice %17 {offsets = [1, 0], sizes = [1, 128], strides = [1, 1]} : vector<2x128xf32> to vector<1x128xf32>
    %25 = vector.broadcast %23 : vector<128x1xf32> to vector<128x128xf32>
    %26 = vector.broadcast %24 : vector<1x128xf32> to vector<128x128xf32>
    %27 = arith.mulf %25, %26 : vector<128x128xf32>
    %28 = arith.addf %22, %27 : vector<128x128xf32>
    %c0_14 = arith.constant 0 : index
    %c0_15 = arith.constant 0 : index
    %29 = vector.load %arg8[%c0_14, %c0_15] : memref<128x1xf32, #tpu.memory_space<vmem>>, vector<128x1xf32>
    %c0_16 = arith.constant 0 : index
    %c0_17 = arith.constant 0 : index
    %30 = vector.load %arg9[%c0_16, %c0_17] : memref<1x128xf32, #tpu.memory_space<vmem>>, vector<1x128xf32>
    %31 = vector.broadcast %29 : vector<128x1xf32> to vector<128x128xf32>
    %32 = vector.broadcast %30 : vector<1x128xf32> to vector<128x128xf32>
    %33 = arith.addf %31, %32 : vector<128x128xf32>
    %cst_18 = arith.constant 2.000000e+00 : f32
    %34 = vector.broadcast %cst_18 : f32 to vector<128x128xf32>
    %35 = arith.mulf %34, %28 : vector<128x128xf32>
    %36 = arith.subf %33, %35 : vector<128x128xf32>
    %cst_19 = arith.constant 9.99999996E-13 : f32
    %37 = vector.broadcast %cst_19 : f32 to vector<128x128xf32>
    %38 = arith.maximumf %36, %37 : vector<128x128xf32>
    %c0_20 = arith.constant 0 : index
    %c0_21 = arith.constant 0 : index
    %39 = vector.load %arg10[%c0_20, %c0_21] : memref<1x128xf32, #tpu.memory_space<vmem>>, vector<1x128xf32>
    %40 = vector.broadcast %39 : vector<1x128xf32> to vector<128x128xf32>
    %41 = arith.subf %15, %40 : vector<128x128xf32>
    %c0_22 = arith.constant 0 : index
    %c0_23 = arith.constant 0 : index
    %42 = vector.load %arg12[%c0_22, %c0_23] : memref<1x128xf32, #tpu.memory_space<vmem>>, vector<1x128xf32>
    %43 = vector.broadcast %42 : vector<1x128xf32> to vector<128x128xf32>
    %44 = arith.mulf %41, %43 : vector<128x128xf32>
    %cst_24 = arith.constant 0.000000e+00 : f32
    %45 = vector.broadcast %cst_24 : f32 to vector<128x128xf32>
    %46 = arith.maximumf %44, %45 : vector<128x128xf32>
    %c0_25 = arith.constant 0 : index
    %c0_26 = arith.constant 0 : index
    %47 = vector.load %arg11[%c0_25, %c0_26] : memref<128x1xf32, #tpu.memory_space<vmem>>, vector<128x1xf32>
    %48 = vector.broadcast %47 : vector<128x1xf32> to vector<128x128xf32>
    %49 = arith.subf %15, %48 : vector<128x128xf32>
    %c0_27 = arith.constant 0 : index
    %c0_28 = arith.constant 0 : index
    %50 = vector.load %arg13[%c0_27, %c0_28] : memref<128x1xf32, #tpu.memory_space<vmem>>, vector<128x1xf32>
    %51 = vector.broadcast %50 : vector<128x1xf32> to vector<128x128xf32>
    %52 = arith.mulf %49, %51 : vector<128x128xf32>
    %cst_29 = arith.constant 0.000000e+00 : f32
    %53 = vector.broadcast %cst_29 : f32 to vector<128x128xf32>
    %54 = arith.maximumf %52, %53 : vector<128x128xf32>
    %cst_30 = arith.constant 0.00999999977 : f32
    %55 = vector.broadcast %cst_30 : f32 to vector<128x128xf32>
    %56 = arith.mulf %46, %55 : vector<128x128xf32>
    %cst_31 = arith.constant 1.000000e+00 : f32
    %57 = vector.broadcast %cst_31 : f32 to vector<128x128xf32>
    %58 = arith.addf %57, %56 : vector<128x128xf32>
    %59 = arith.mulf %58, %58 : vector<128x128xf32>
    %60 = arith.mulf %59, %59 : vector<128x128xf32>
    %61 = arith.mulf %58, %60 : vector<128x128xf32>
    %62 = arith.mulf %60, %60 : vector<128x128xf32>
    %63 = arith.mulf %62, %62 : vector<128x128xf32>
    %64 = arith.mulf %63, %63 : vector<128x128xf32>
    %65 = arith.mulf %61, %64 : vector<128x128xf32>
    %66 = arith.mulf %64, %64 : vector<128x128xf32>
    %67 = arith.mulf %65, %66 : vector<128x128xf32>
    %cst_32 = arith.constant 3.000000e+38 : f32
    %68 = vector.broadcast %cst_32 : f32 to vector<128x128xf32>
    %69 = arith.minimumf %67, %68 : vector<128x128xf32>
    %70 = tpu.reciprocal %69 {approx = true} : vector<128x128xf32> -> vector<128x128xf32>
    %71 = arith.mulf %69, %70 : vector<128x128xf32>
    %cst_33 = arith.constant 2.000000e+00 : f32
    %72 = vector.broadcast %cst_33 : f32 to vector<128x128xf32>
    %73 = arith.subf %72, %71 : vector<128x128xf32>
    %74 = arith.mulf %70, %73 : vector<128x128xf32>
    %cst_34 = arith.constant 0.994508147 : f32
    %75 = vector.broadcast %cst_34 : f32 to vector<128x128xf32>
    %76 = arith.mulf %75, %74 : vector<128x128xf32>
    %cst_35 = arith.constant 0.00999999977 : f32
    %77 = vector.broadcast %cst_35 : f32 to vector<128x128xf32>
    %78 = arith.mulf %54, %77 : vector<128x128xf32>
    %cst_36 = arith.constant 1.000000e+00 : f32
    %79 = vector.broadcast %cst_36 : f32 to vector<128x128xf32>
    %80 = arith.addf %79, %78 : vector<128x128xf32>
    %81 = arith.mulf %80, %80 : vector<128x128xf32>
    %82 = arith.mulf %81, %81 : vector<128x128xf32>
    %83 = arith.mulf %80, %82 : vector<128x128xf32>
    %84 = arith.mulf %82, %82 : vector<128x128xf32>
    %85 = arith.mulf %84, %84 : vector<128x128xf32>
    %86 = arith.mulf %85, %85 : vector<128x128xf32>
    %87 = arith.mulf %83, %86 : vector<128x128xf32>
    %88 = arith.mulf %86, %86 : vector<128x128xf32>
    %89 = arith.mulf %87, %88 : vector<128x128xf32>
    %cst_37 = arith.constant 3.000000e+38 : f32
    %90 = vector.broadcast %cst_37 : f32 to vector<128x128xf32>
    %91 = arith.minimumf %89, %90 : vector<128x128xf32>
    %92 = tpu.reciprocal %91 {approx = true} : vector<128x128xf32> -> vector<128x128xf32>
    %93 = arith.mulf %91, %92 : vector<128x128xf32>
    %cst_38 = arith.constant 2.000000e+00 : f32
    %94 = vector.broadcast %cst_38 : f32 to vector<128x128xf32>
    %95 = arith.subf %94, %93 : vector<128x128xf32>
    %96 = arith.mulf %92, %95 : vector<128x128xf32>
    %cst_39 = arith.constant 0.994508147 : f32
    %97 = vector.broadcast %cst_39 : f32 to vector<128x128xf32>
    %98 = arith.mulf %97, %96 : vector<128x128xf32>
    %99 = arith.addf %76, %98 : vector<128x128xf32>
    %100 = arith.mulf %76, %98 : vector<128x128xf32>
    %101 = arith.subf %99, %100 : vector<128x128xf32>
    %cst_40 = arith.constant 0.00999999977 : f32
    %102 = vector.broadcast %cst_40 : f32 to vector<128x128xf32>
    %103 = arith.mulf %38, %102 : vector<128x128xf32>
    %cst_41 = arith.constant 1.000000e+00 : f32
    %104 = vector.broadcast %cst_41 : f32 to vector<128x128xf32>
    %105 = arith.addf %104, %103 : vector<128x128xf32>
    %106 = arith.mulf %105, %105 : vector<128x128xf32>
    %107 = arith.mulf %106, %106 : vector<128x128xf32>
    %108 = arith.mulf %105, %107 : vector<128x128xf32>
    %109 = arith.mulf %107, %107 : vector<128x128xf32>
    %110 = arith.mulf %109, %109 : vector<128x128xf32>
    %111 = arith.mulf %110, %110 : vector<128x128xf32>
    %112 = arith.mulf %108, %111 : vector<128x128xf32>
    %113 = arith.mulf %111, %111 : vector<128x128xf32>
    %114 = arith.mulf %112, %113 : vector<128x128xf32>
    %cst_42 = arith.constant 3.000000e+38 : f32
    %115 = vector.broadcast %cst_42 : f32 to vector<128x128xf32>
    %116 = arith.minimumf %114, %115 : vector<128x128xf32>
    %117 = tpu.reciprocal %116 {approx = true} : vector<128x128xf32> -> vector<128x128xf32>
    %118 = arith.mulf %116, %117 : vector<128x128xf32>
    %cst_43 = arith.constant 2.000000e+00 : f32
    %119 = vector.broadcast %cst_43 : f32 to vector<128x128xf32>
    %120 = arith.subf %119, %118 : vector<128x128xf32>
    %121 = arith.mulf %117, %120 : vector<128x128xf32>
    %cst_44 = arith.constant 0.994508147 : f32
    %122 = vector.broadcast %cst_44 : f32 to vector<128x128xf32>
    %123 = arith.mulf %122, %121 : vector<128x128xf32>
    %124 = arith.addf %123, %123 : vector<128x128xf32>
    %125 = arith.mulf %123, %123 : vector<128x128xf32>
    %126 = arith.subf %124, %125 : vector<128x128xf32>
    %cst_45 = arith.constant 1.000000e+00 : f32
    %127 = vector.broadcast %cst_45 : f32 to vector<128x128xf32>
    %128 = arith.mulf %101, %127 : vector<128x128xf32>
    %cst_46 = arith.constant 9.99999996E-13 : f32
    %129 = vector.broadcast %cst_46 : f32 to vector<128x128xf32>
    %130 = arith.addf %128, %129 : vector<128x128xf32>
    %cst_47 = arith.constant 1.000000e+00 : f32
    %131 = vector.broadcast %cst_47 : f32 to vector<128x128xf32>
    %132 = arith.mulf %126, %131 : vector<128x128xf32>
    %cst_48 = arith.constant 9.99999996E-13 : f32
    %133 = vector.broadcast %cst_48 : f32 to vector<128x128xf32>
    %134 = arith.addf %132, %133 : vector<128x128xf32>
    %cst_49 = arith.constant 9.99999996E-13 : f32
    %135 = vector.broadcast %cst_49 : f32 to vector<128x128xf32>
    %136 = arith.addf %134, %135 : vector<128x128xf32>
    %137 = math.log %136 : vector<128x128xf32>
    %138 = arith.mulf %130, %137 : vector<128x128xf32>
    %cst_50 = arith.constant 1.000000e+00 : f32
    %139 = vector.broadcast %cst_50 : f32 to vector<128x128xf32>
    %140 = arith.subf %139, %130 : vector<128x128xf32>
    %cst_51 = arith.constant 1.000000e+00 : f32
    %141 = vector.broadcast %cst_51 : f32 to vector<128x128xf32>
    %142 = arith.subf %141, %134 : vector<128x128xf32>
    %cst_52 = arith.constant 9.99999996E-13 : f32
    %143 = vector.broadcast %cst_52 : f32 to vector<128x128xf32>
    %144 = arith.addf %142, %143 : vector<128x128xf32>
    %145 = math.log %144 : vector<128x128xf32>
    %146 = arith.mulf %140, %145 : vector<128x128xf32>
    %147 = arith.addf %138, %146 : vector<128x128xf32>
    %c128_i32 = arith.constant 128 : i32
    %148 = arith.muli %arg0, %c128_i32 : i32
    %c128_i32_53 = arith.constant 128 : i32
    %149 = arith.muli %arg1, %c128_i32_53 : i32
    %c128_i32_54 = arith.constant 128 : i32
    %150 = arith.addi %149, %c128_i32_54 : i32
    %151 = arith.cmpi slt, %148, %150 : i32
    %c128_i32_55 = arith.constant 128 : i32
    %152 = arith.addi %148, %c128_i32_55 : i32
    %153 = arith.cmpi slt, %149, %152 : i32
    %154 = arith.andi %151, %153 : i1
    %c128_i32_56 = arith.constant 128 : i32
    %155 = arith.addi %148, %c128_i32_56 : i32
    %c32_i32 = arith.constant 32 : i32
    %156 = arith.cmpi sgt, %155, %c32_i32 : i32
    %157 = arith.ori %154, %156 : i1
    %c128_i32_57 = arith.constant 128 : i32
    %158 = arith.addi %149, %c128_i32_57 : i32
    %c32_i32_58 = arith.constant 32 : i32
    %159 = arith.cmpi sgt, %158, %c32_i32_58 : i32
    %160 = arith.ori %157, %159 : i1
    %161 = arith.extui %160 : i1 to i32
    %c0_i32_59 = arith.constant 0 : i32
    %162 = arith.cmpi ne, %161, %c0_i32_59 : i32
    scf.if %162 {
      %166 = tpu.iota {dimensions = array<i32: 0>} : vector<128x128xi32>
      %167 = vector.broadcast %148 : i32 to vector<128x128xi32>
      %168 = arith.addi %167, %166 : vector<128x128xi32>
      %169 = tpu.iota {dimensions = array<i32: 1>} : vector<128x128xi32>
      %170 = vector.broadcast %149 : i32 to vector<128x128xi32>
      %171 = arith.addi %170, %169 : vector<128x128xi32>
      %172 = arith.cmpi ne, %168, %171 : vector<128x128xi32>
      %c32_i32_61 = arith.constant 32 : i32
      %173 = vector.broadcast %c32_i32_61 : i32 to vector<128x128xi32>
      %174 = arith.cmpi slt, %168, %173 : vector<128x128xi32>
      %175 = arith.andi %172, %174 : vector<128x128xi1>
      %c32_i32_62 = arith.constant 32 : i32
      %176 = vector.broadcast %c32_i32_62 : i32 to vector<128x128xi32>
      %177 = arith.cmpi slt, %171, %176 : vector<128x128xi32>
      %178 = arith.andi %175, %177 : vector<128x128xi1>
      %cst_63 = arith.constant 0.000000e+00 : f32
      %179 = vector.broadcast %cst_63 : f32 to vector<128x128xf32>
      %180 = arith.select %178, %147, %179 : vector<128x128xi1>, vector<128x128xf32>
      %cst_64 = arith.constant dense<0.000000e+00> : vector<128xf32>
      %181 = vector.multi_reduction <add>, %180, %cst_64 [0] : vector<128x128xf32> to vector<128xf32>
      %182 = vector.shape_cast %181 : vector<128xf32> to vector<1x128xf32>
      %c0_65 = arith.constant 0 : index
      %c0_66 = arith.constant 0 : index
      %c0_67 = arith.constant 0 : index
      %183 = vector.load %arg14[%c0_65, %c0_66, %c0_67] : memref<1x1x128xf32, #tpu.memory_space<vmem>>, vector<1x1x128xf32>
      %184 = vector.shape_cast %182 : vector<1x128xf32> to vector<1x1x128xf32>
      %185 = arith.addf %183, %184 : vector<1x1x128xf32>
      %c0_68 = arith.constant 0 : index
      %c0_69 = arith.constant 0 : index
      %c0_70 = arith.constant 0 : index
      %186 = vector.load %arg14[%c0_68, %c0_69, %c0_70] : memref<1x1x128xf32, #tpu.memory_space<vmem>>, vector<1x1x128xf32>
      tpu.vector_store %arg14[%c0_68, %c0_69, %c0_70], %185 {strides = array<i32>} : memref<1x1x128xf32, #tpu.memory_space<vmem>>, vector<1x1x128xf32>,
    } else {
    }
    %true = arith.constant true
    %163 = arith.xori %160, %true : i1
    %164 = arith.extui %163 : i1 to i32
    %c0_i32_60 = arith.constant 0 : i32
    %165 = arith.cmpi ne, %164, %c0_i32_60 : i32
    scf.if %165 {
      %cst_61 = arith.constant dense<0.000000e+00> : vector<128xf32>
      %166 = vector.multi_reduction <add>, %147, %cst_61 [0] : vector<128x128xf32> to vector<128xf32>
      %167 = vector.shape_cast %166 : vector<128xf32> to vector<1x128xf32>
      %c0_62 = arith.constant 0 : index
      %c0_63 = arith.constant 0 : index
      %c0_64 = arith.constant 0 : index
      %168 = vector.load %arg14[%c0_62, %c0_63, %c0_64] : memref<1x1x128xf32, #tpu.memory_space<vmem>>, vector<1x1x128xf32>
      %169 = vector.shape_cast %167 : vector<1x128xf32> to vector<1x1x128xf32>
      %170 = arith.addf %168, %169 : vector<1x1x128xf32>
      %c0_65 = arith.constant 0 : index
      %c0_66 = arith.constant 0 : index
      %c0_67 = arith.constant 0 : index
      %171 = vector.load %arg14[%c0_65, %c0_66, %c0_67] : memref<1x1x128xf32, #tpu.memory_space<vmem>>, vector<1x1x128xf32>
      tpu.vector_store %arg14[%c0_65, %c0_66, %c0_67], %170 {strides = array<i32>} : memref<1x1x128xf32, #tpu.memory_space<vmem>>, vector<1x1x128xf32>,
    } else {
    }
    return
  }
  func.func @transform_0(%arg0: i32, %arg1: i32) -> (i32, i32) {
    %c0_i32 = arith.constant 0 : i32
    %c0_i32_0 = arith.constant 0 : i32
    return %arg0, %c0_i32 : i32, i32
  }
  func.func @transform_1(%arg0: i32, %arg1: i32) -> (i32, i32) {
    %c0_i32 = arith.constant 0 : i32
    %c0_i32_0 = arith.constant 0 : i32
    return %c0_i32, %arg1 : i32, i32
  }
  func.func @transform_2(%arg0: i32, %arg1: i32) -> (i32, i32) {
    %c0_i32 = arith.constant 0 : i32
    %c0_i32_0 = arith.constant 0 : i32
    return %arg0, %c0_i32 : i32, i32
  }
  func.func @transform_3(%arg0: i32, %arg1: i32) -> (i32, i32) {
    %c0_i32 = arith.constant 0 : i32
    %c0_i32_0 = arith.constant 0 : i32
    return %c0_i32, %arg1 : i32, i32
  }
  func.func @transform_4(%arg0: i32, %arg1: i32) -> (i32, i32) {
    %c0_i32 = arith.constant 0 : i32
    %c0_i32_0 = arith.constant 0 : i32
    return %arg0, %c0_i32 : i32, i32
  }
  func.func @transform_5(%arg0: i32, %arg1: i32) -> (i32, i32) {
    %c0_i32 = arith.constant 0 : i32
    %c0_i32_0 = arith.constant 0 : i32
    return %c0_i32, %arg1 : i32, i32
  }
  func.func @transform_6(%arg0: i32, %arg1: i32) -> (i32, i32) {
    %c0_i32 = arith.constant 0 : i32
    %c0_i32_0 = arith.constant 0 : i32
    return %arg0, %c0_i32 : i32, i32
  }
  func.func @transform_7(%arg0: i32, %arg1: i32) -> (i32, i32) {
    %c0_i32 = arith.constant 0 : i32
    %c0_i32_0 = arith.constant 0 : i32
    return %c0_i32, %arg1 : i32, i32
  }
  func.func @transform_8(%arg0: i32, %arg1: i32) -> (i32, i32) {
    %c0_i32 = arith.constant 0 : i32
    %c0_i32_0 = arith.constant 0 : i32
    return %c0_i32, %arg1 : i32, i32
  }
  func.func @transform_9(%arg0: i32, %arg1: i32) -> (i32, i32) {
    %c0_i32 = arith.constant 0 : i32
    %c0_i32_0 = arith.constant 0 : i32
    return %arg0, %c0_i32 : i32, i32
  }
  func.func @transform_10(%arg0: i32, %arg1: i32) -> (i32, i32) {
    %c0_i32 = arith.constant 0 : i32
    %c0_i32_0 = arith.constant 0 : i32
    return %c0_i32, %arg1 : i32, i32
  }
  func.func @transform_11(%arg0: i32, %arg1: i32) -> (i32, i32) {
    %c0_i32 = arith.constant 0 : i32
    %c0_i32_0 = arith.constant 0 : i32
    return %arg0, %c0_i32 : i32, i32
  }
  func.func @transform_12(%arg0: i32, %arg1: i32) -> (i32, i32, i32) {
    %c0_i32 = arith.constant 0 : i32
    %c0_i32_0 = arith.constant 0 : i32
    %c0_i32_1 = arith.constant 0 : i32
    return %arg0, %c0_i32, %c0_i32_0 : i32, i32, i32
  }
}

</mosaic_0001>

<llo_original>
// kernel: tpu_custom_call.1
$region0: #{tpu_custom_call.1}
  #allocation0 [shape = 'u32[]', space=smem, size = 0x4, offset = 0x4, fixed_abs, tag = 'smem constant byte address 0x4 - core index']
  #allocation1 [shape = 'u32[144,128]{1,0:T(1,128)}', space=vmem, size = 0x12000, scoped, tag = 'internal scratch']
  %s0 = inlined_call_operand.vmem [shape: f32[128,16], index: 0, kind: input, shape index: {}]
  %s1 = inlined_call_operand.vmem [shape: f32[16,128], index: 1, kind: input, shape index: {}]
  %s2 = inlined_call_operand.vmem [shape: f32[128,2], index: 2, kind: input, shape index: {}]
  %s3 = inlined_call_operand.vmem [shape: f32[2,128], index: 3, kind: input, shape index: {}]
  %s4 = inlined_call_operand.vmem [shape: f32[128,1], index: 4, kind: input, shape index: {}]
  %s5 = inlined_call_operand.vmem [shape: f32[1,128], index: 5, kind: input, shape index: {}]
  %s6 = inlined_call_operand.vmem [shape: f32[128,1], index: 6, kind: input, shape index: {}]
  %s7 = inlined_call_operand.vmem [shape: f32[1,128], index: 7, kind: input, shape index: {}]
  %s8 = inlined_call_operand.vmem [shape: f32[1,128], index: 8, kind: input, shape index: {}]
  %s9 = inlined_call_operand.vmem [shape: f32[128,1], index: 9, kind: input, shape index: {}]
  %s10 = inlined_call_operand.vmem [shape: f32[1,128], index: 10, kind: input, shape index: {}]
  %s11 = inlined_call_operand.vmem [shape: f32[128,1], index: 11, kind: input, shape index: {}]
  %s12 = inlined_call_operand.hbm [shape: f32[1,1,128], index: 12, kind: output, shape index: {}]
  %s13 = sld [smem:[#allocation0]]
  $region70: #{tpu_custom_call.1} parent=0
    _
  %s15 = ssub.s32 1, %s13
  %s16 = scalar_select 0, %s15, %s13
  $region1: #{tpu_custom_call.1} parent=0
    #allocation2 [shape = 'u8[512]{0}', space=vmem, size = 0x400, scoped, tag = 'output window, operand 0, single buffered']
    #allocation3 [shape = 's32[1]{0}', space=sflag, size = 0x4, scoped, tag = 'scoped memory for tpu_custom_call.1']
    %17 = vsyncpa [#allocation3], 0
    // Predicated region
    $region2: #{tpu_custom_call.1} parent=1 // pred_check
      _
    $region3: #{tpu_custom_call.1} parent=1 // pred_check_branch
      %19 = sbr.rel (0) target = $region5
    $region4: #{tpu_custom_call.1} parent=1 // pred_region
      _
    $region5: #{tpu_custom_call.1} parent=1 // pred_fallthru
      _
    // Predicated region
    $region6: #{tpu_custom_call.1} parent=1 // pred_check
      _
    $region7: #{tpu_custom_call.1} parent=1 // pred_check_branch
      %21 = sbr.rel (0) target = $region9
    $region8: #{tpu_custom_call.1} parent=1 // pred_region
      _
    $region9: #{tpu_custom_call.1} parent=1 // pred_fallthru
      _
    // Predicated region
    $region10: #{tpu_custom_call.1} parent=1 // pred_check
      _
    $region11: #{tpu_custom_call.1} parent=1 // pred_check_branch
      %23 = sbr.rel (0) target = $region13
    $region12: #{tpu_custom_call.1} parent=1 // pred_region
      _
    $region13: #{tpu_custom_call.1} parent=1 // pred_fallthru
      _
    // Predicated region
    $region14: #{tpu_custom_call.1} parent=1 // pred_check
      _
    $region15: #{tpu_custom_call.1} parent=1 // pred_check_branch
      %25 = sbr.rel (0) target = $region17
    $region16: #{tpu_custom_call.1} parent=1 // pred_region
      _
    $region17: #{tpu_custom_call.1} parent=1 // pred_fallthru
      _
    // Predicated region
    $region18: #{tpu_custom_call.1} parent=1 // pred_check
      _
    $region19: #{tpu_custom_call.1} parent=1 // pred_check_branch
      %27 = sbr.rel (0) target = $region21
    $region20: #{tpu_custom_call.1} parent=1 // pred_region
      _
    $region21: #{tpu_custom_call.1} parent=1 // pred_fallthru
      _
    // Predicated region
    $region22: #{tpu_custom_call.1} parent=1 // pred_check
      _
    $region23: #{tpu_custom_call.1} parent=1 // pred_check_branch
      %29 = sbr.rel (0) target = $region25
    $region24: #{tpu_custom_call.1} parent=1 // pred_region
      _
    $region25: #{tpu_custom_call.1} parent=1 // pred_fallthru
      _
    // Predicated region
    $region26: #{tpu_custom_call.1} parent=1 // pred_check
      _
    $region27: #{tpu_custom_call.1} parent=1 // pred_check_branch
      %31 = sbr.rel (0) target = $region29
    $region28: #{tpu_custom_call.1} parent=1 // pred_region
      _
    $region29: #{tpu_custom_call.1} parent=1 // pred_fallthru
      _
    // Predicated region
    $region30: #{tpu_custom_call.1} parent=1 // pred_check
      _
    $region31: #{tpu_custom_call.1} parent=1 // pred_check_branch
      %33 = sbr.rel (0) target = $region33
    $region32: #{tpu_custom_call.1} parent=1 // pred_region
      _
    $region33: #{tpu_custom_call.1} parent=1 // pred_fallthru
      _
    // Predicated region
    $region34: #{tpu_custom_call.1} parent=1 // pred_check
      _
    $region35: #{tpu_custom_call.1} parent=1 // pred_check_branch
      %35 = sbr.rel (0) target = $region37
    $region36: #{tpu_custom_call.1} parent=1 // pred_region
      _
    $region37: #{tpu_custom_call.1} parent=1 // pred_fallthru
      _
    // Predicated region
    $region38: #{tpu_custom_call.1} parent=1 // pred_check
      _
    $region39: #{tpu_custom_call.1} parent=1 // pred_check_branch
      %37 = sbr.rel (0) target = $region41
    $region40: #{tpu_custom_call.1} parent=1 // pred_region
      _
    $region41: #{tpu_custom_call.1} parent=1 // pred_fallthru
      _
    // Predicated region
    $region42: #{tpu_custom_call.1} parent=1 // pred_check
      _
    $region43: #{tpu_custom_call.1} parent=1 // pred_check_branch
      %39 = sbr.rel (0) target = $region45
    $region44: #{tpu_custom_call.1} parent=1 // pred_region
      _
    $region45: #{tpu_custom_call.1} parent=1 // pred_fallthru
      _
    // Predicated region
    $region46: #{tpu_custom_call.1} parent=1 // pred_check
      _
    $region47: #{tpu_custom_call.1} parent=1 // pred_check_branch
      %41 = sbr.rel (0) target = $region49
    $region48: #{tpu_custom_call.1} parent=1 // pred_region
      _
    $region49: #{tpu_custom_call.1} parent=1 // pred_fallthru
      _
    %p42 = scmp.eq.s32.totalorder 0, 0
    // Predicated region
    $region50: #{tpu_custom_call.1} parent=1 // pred_check
      %p43 = pneg %p42
    $region51: #{tpu_custom_call.1} parent=1 // pred_check_branch
      %45 = sbr.rel (%p43) target = $region53
    $region52: #{tpu_custom_call.1} parent=1 // pred_region
      %46 = vst [vmem:[#allocation2] sm:$0x1] 0.0
    $region53: #{tpu_custom_call.1} parent=1 // pred_fallthru
      _
    %v47 = vld [vmem:[%s0] sm:$0xff]
    %v48 = vld [vmem:[%s0 + $0x8] sm:$0xff]
    %v49 = vld [vmem:[%s0 + $0x10] sm:$0xff]
    %v50 = vld [vmem:[%s0 + $0x18] sm:$0xff]
    %v51 = vld [vmem:[%s0 + $0x20] sm:$0xff]
    %v52 = vld [vmem:[%s0 + $0x28] sm:$0xff]
    %v53 = vld [vmem:[%s0 + $0x30] sm:$0xff]
    %v54 = vld [vmem:[%s0 + $0x38] sm:$0xff]
    %v55 = vld [vmem:[%s0 + $0x40] sm:$0xff]
    %v56 = vld [vmem:[%s0 + $0x48] sm:$0xff]
    %v57 = vld [vmem:[%s0 + $0x50] sm:$0xff]
    %v58 = vld [vmem:[%s0 + $0x58] sm:$0xff]
    %v59 = vld [vmem:[%s0 + $0x60] sm:$0xff]
    %v60 = vld [vmem:[%s0 + $0x68] sm:$0xff]
    %v61 = vld [vmem:[%s0 + $0x70] sm:$0xff]
    %v62 = vld [vmem:[%s0 + $0x78] sm:$0xff]
    %v63 = vld [vmem:[%s1] sm:$0xff]
    %v64 = vld [vmem:[%s1 + $0x8] sm:$0xff]
    %vm65 = vcmask 130048
    %v67 = vsel %vm65, %v47, 0
    %v70 = vsel %vm65, %v48, 0
    %v73 = vsel %vm65, %v49, 0
    %v76 = vsel %vm65, %v50, 0
    %v79 = vsel %vm65, %v51, 0
    %v82 = vsel %vm65, %v52, 0
    %v85 = vsel %vm65, %v53, 0
    %v88 = vsel %vm65, %v54, 0
    %v91 = vsel %vm65, %v55, 0
    %v94 = vsel %vm65, %v56, 0
    %v97 = vsel %vm65, %v57, 0
    %v100 = vsel %vm65, %v58, 0
    %v103 = vsel %vm65, %v59, 0
    %v106 = vsel %vm65, %v60, 0
    %v109 = vsel %vm65, %v61, 0
    %v112 = vsel %vm65, %v62, 0
    %114 = vmatprep.subr.mxu0 0.0
    %115 = vmatpush1.msra.mxu0 0.0
    %116 = vmatprep.subr.mxu0 0.0
    %117 = vmatpush1.msra.mxu0 0.0
    %118 = vmatprep.subr.mxu0 0.0
    %119 = vmatpush1.msra.mxu0 0.0
    %120 = vmatprep.subr.mxu0 0.0
    %121 = vmatpush1.msra.mxu0 0.0
    %122 = vmatprep.subr.mxu0 0.0
    %123 = vmatpush1.msra.mxu0 0.0
    %124 = vmatprep.subr.mxu0 0.0
    %125 = vmatpush1.msra.mxu0 0.0
    %126 = vmatprep.subr.mxu0 0.0
    %127 = vmatpush1.msra.mxu0 0.0
    %128 = vmatprep.subr.mxu0 0.0
    %129 = vmatpush1.msra.mxu0 0.0
    %130 = vmatprep.subr.mxu0 0.0
    %131 = vmatpush1.msra.mxu0 0.0
    %132 = vmatprep.subr.mxu0 0.0
    %133 = vmatpush1.msra.mxu0 0.0
    %134 = vmatprep.subr.mxu0 0.0
    %135 = vmatpush1.msra.mxu0 0.0
    %136 = vmatprep.subr.mxu0 0.0
    %137 = vmatpush1.msra.mxu0 0.0
    %138 = vmatprep.subr.mxu0 0.0
    %139 = vmatpush1.msra.mxu0 0.0
    %140 = vmatprep.subr.mxu0 0.0
    %141 = vmatpush1.msra.mxu0 0.0
    %142 = vmatprep.subr.mxu0 0.0
    %143 = vmatpush1.msra.mxu0 %v64
    %144 = vmatprep.subr.mxu0 0.0
    %145 = vmatpush1.msra.mxu0 %v63
    %146 = vmatprep.subr.mxu0 0.0
    %147 = vmatpush2.msra.mxu0 0.0
    %148 = vmatprep.subr.mxu0 0.0
    %149 = vmatpush2.msra.mxu0 0.0
    %150 = vmatprep.subr.mxu0 0.0
    %151 = vmatpush2.msra.mxu0 0.0
    %152 = vmatprep.subr.mxu0 0.0
    %153 = vmatpush2.msra.mxu0 0.0
    %154 = vmatprep.subr.mxu0 0.0
    %155 = vmatpush2.msra.mxu0 0.0
    %156 = vmatprep.subr.mxu0 0.0
    %157 = vmatpush2.msra.mxu0 0.0
    %158 = vmatprep.subr.mxu0 0.0
    %159 = vmatpush2.msra.mxu0 0.0
    %160 = vmatprep.subr.mxu0 0.0
    %161 = vmatpush2.msra.mxu0 0.0
    %162 = vmatprep.subr.mxu0 0.0
    %163 = vmatpush2.msra.mxu0 0.0
    %164 = vmatprep.subr.mxu0 0.0
    %165 = vmatpush2.msra.mxu0 0.0
    %166 = vmatprep.subr.mxu0 0.0
    %167 = vmatpush2.msra.mxu0 0.0
    %168 = vmatprep.subr.mxu0 0.0
    %169 = vmatpush2.msra.mxu0 0.0
    %170 = vmatprep.subr.mxu0 0.0
    %171 = vmatpush2.msra.mxu0 0.0
    %172 = vmatprep.subr.mxu0 0.0
    %173 = vmatpush2.msra.mxu0 0.0
    %174 = vmatprep.subr.mxu0 0.0
    %175 = vmatpush2.msra.mxu0 0.0
    %176 = vmatprep.subr.mxu0 0.0
    %177 = vmatpush2.msra.mxu0 0.0
    %178 = vmatprep.mubr.f32.mxu0 0.0
    %179 = vmatmul.mubr.f32.gmra.mxu0 %v67
    %v180 = vpop.f32.mrf.mxu0
    %v181 = vadd.f32 0.0, %v180
    %v182 = vpop.f32.mrf.mxu0
    %183 = vmatprep.mubr.f32.mxu0 0.0
    %184 = vmatmul.mubr.f32.gmra.mxu0 %v70
    %v185 = vpop.f32.mrf.mxu0
    %v186 = vadd.f32 0.0, %v185
    %v187 = vpop.f32.mrf.mxu0
    %188 = vmatprep.mubr.f32.mxu0 0.0
    %189 = vmatmul.mubr.f32.gmra.mxu0 %v73
    %v190 = vpop.f32.mrf.mxu0
    %v191 = vadd.f32 0.0, %v190
    %v192 = vpop.f32.mrf.mxu0
    %193 = vmatprep.mubr.f32.mxu0 0.0
    %194 = vmatmul.mubr.f32.gmra.mxu0 %v76
    %v195 = vpop.f32.mrf.mxu0
    %v196 = vadd.f32 0.0, %v195
    %v197 = vpop.f32.mrf.mxu0
    %198 = vmatprep.mubr.f32.mxu0 0.0
    %199 = vmatmul.mubr.f32.gmra.mxu0 %v79
    %v200 = vpop.f32.mrf.mxu0
    %v201 = vadd.f32 0.0, %v200
    %v202 = vpop.f32.mrf.mxu0
    %203 = vmatprep.mubr.f32.mxu0 0.0
    %204 = vmatmul.mubr.f32.gmra.mxu0 %v82
    %v205 = vpop.f32.mrf.mxu0
    %v206 = vadd.f32 0.0, %v205
    %v207 = vpop.f32.mrf.mxu0
    %208 = vmatprep.mubr.f32.mxu0 0.0
    %209 = vmatmul.mubr.f32.gmra.mxu0 %v85
    %v210 = vpop.f32.mrf.mxu0
    %v211 = vadd.f32 0.0, %v210
    %v212 = vpop.f32.mrf.mxu0
    %213 = vmatprep.mubr.f32.mxu0 0.0
    %214 = vmatmul.mubr.f32.gmra.mxu0 %v88
    %v215 = vpop.f32.mrf.mxu0
    %v216 = vadd.f32 0.0, %v215
    %v217 = vpop.f32.mrf.mxu0
    %218 = vmatprep.mubr.f32.mxu0 0.0
    %219 = vmatmul.mubr.f32.gmra.mxu0 %v91
    %v220 = vpop.f32.mrf.mxu0
    %v221 = vadd.f32 0.0, %v220
    %v222 = vpop.f32.mrf.mxu0
    %223 = vmatprep.mubr.f32.mxu0 0.0
    %224 = vmatmul.mubr.f32.gmra.mxu0 %v94
    %v225 = vpop.f32.mrf.mxu0
    %v226 = vadd.f32 0.0, %v225
    %v227 = vpop.f32.mrf.mxu0
    %228 = vmatprep.mubr.f32.mxu0 0.0
    %229 = vmatmul.mubr.f32.gmra.mxu0 %v97
    %v230 = vpop.f32.mrf.mxu0
    %v231 = vadd.f32 0.0, %v230
    %v232 = vpop.f32.mrf.mxu0
    %233 = vmatprep.mubr.f32.mxu0 0.0
    %234 = vmatmul.mubr.f32.gmra.mxu0 %v100
    %v235 = vpop.f32.mrf.mxu0
    %v236 = vadd.f32 0.0, %v235
    %v237 = vpop.f32.mrf.mxu0
    %238 = vmatprep.mubr.f32.mxu0 0.0
    %239 = vmatmul.mubr.f32.gmra.mxu0 %v103
    %v240 = vpop.f32.mrf.mxu0
    %v241 = vadd.f32 0.0, %v240
    %v242 = vpop.f32.mrf.mxu0
    %243 = vmatprep.mubr.f32.mxu0 0.0
    %244 = vmatmul.mubr.f32.gmra.mxu0 %v106
    %v245 = vpop.f32.mrf.mxu0
    %v246 = vadd.f32 0.0, %v245
    %v247 = vpop.f32.mrf.mxu0
    %248 = vmatprep.mubr.f32.mxu0 0.0
    %249 = vmatmul.mubr.f32.gmra.mxu0 %v109
    %v250 = vpop.f32.mrf.mxu0
    %v251 = vadd.f32 0.0, %v250
    %v252 = vpop.f32.mrf.mxu0
    %253 = vmatprep.mubr.f32.mxu0 0.0
    %254 = vmatmul.mubr.f32.gmra.mxu0 %v112
    %v255 = vpop.f32.mrf.mxu0
    %v256 = vadd.f32 0.0, %v255
    %v257 = vpop.f32.mrf.mxu0
    %258 = vdwg.mxu0
    %v259 = vld [vmem:[%s4] sm:$0xff]
    %v260 = vld [vmem:[%s4 + $0x8] sm:$0xff]
    %v261 = vld [vmem:[%s4 + $0x10] sm:$0xff]
    %v262 = vld [vmem:[%s4 + $0x18] sm:$0xff]
    %v263 = vld [vmem:[%s4 + $0x20] sm:$0xff]
    %v264 = vld [vmem:[%s4 + $0x28] sm:$0xff]
    %v265 = vld [vmem:[%s4 + $0x30] sm:$0xff]
    %v266 = vld [vmem:[%s4 + $0x38] sm:$0xff]
    %v267 = vld [vmem:[%s4 + $0x40] sm:$0xff]
    %v268 = vld [vmem:[%s4 + $0x48] sm:$0xff]
    %v269 = vld [vmem:[%s4 + $0x50] sm:$0xff]
    %v270 = vld [vmem:[%s4 + $0x58] sm:$0xff]
    %v271 = vld [vmem:[%s4 + $0x60] sm:$0xff]
    %v272 = vld [vmem:[%s4 + $0x68] sm:$0xff]
    %v273 = vld [vmem:[%s4 + $0x70] sm:$0xff]
    %v274 = vld [vmem:[%s4 + $0x78] sm:$0xff]
    %v275 = vld [vmem:[%s5] sm:$0x1]
    %277 = vset.pattern.permute.xlu0 0
    %278 = vperm.xlu0 %277, %v259
    %v279 = vpop.permute.xlu0 %278
    %282 = vset.pattern.permute.xlu0 0
    %283 = vperm.xlu0 %282, %v260
    %v284 = vpop.permute.xlu0 %283
    %287 = vset.pattern.permute.xlu0 0
    %288 = vperm.xlu0 %287, %v261
    %v289 = vpop.permute.xlu0 %288
    %292 = vset.pattern.permute.xlu0 0
    %293 = vperm.xlu0 %292, %v262
    %v294 = vpop.permute.xlu0 %293
    %297 = vset.pattern.permute.xlu0 0
    %298 = vperm.xlu0 %297, %v263
    %v299 = vpop.permute.xlu0 %298
    %302 = vset.pattern.permute.xlu0 0
    %303 = vperm.xlu0 %302, %v264
    %v304 = vpop.permute.xlu0 %303
    %307 = vset.pattern.permute.xlu0 0
    %308 = vperm.xlu0 %307, %v265
    %v309 = vpop.permute.xlu0 %308
    %312 = vset.pattern.permute.xlu0 0
    %313 = vperm.xlu0 %312, %v266
    %v314 = vpop.permute.xlu0 %313
    %317 = vset.pattern.permute.xlu0 0
    %318 = vperm.xlu0 %317, %v267
    %v319 = vpop.permute.xlu0 %318
    %322 = vset.pattern.permute.xlu0 0
    %323 = vperm.xlu0 %322, %v268
    %v324 = vpop.permute.xlu0 %323
    %327 = vset.pattern.permute.xlu0 0
    %328 = vperm.xlu0 %327, %v269
    %v329 = vpop.permute.xlu0 %328
    %332 = vset.pattern.permute.xlu0 0
    %333 = vperm.xlu0 %332, %v270
    %v334 = vpop.permute.xlu0 %333
    %337 = vset.pattern.permute.xlu0 0
    %338 = vperm.xlu0 %337, %v271
    %v339 = vpop.permute.xlu0 %338
    %342 = vset.pattern.permute.xlu0 0
    %343 = vperm.xlu0 %342, %v272
    %v344 = vpop.permute.xlu0 %343
    %347 = vset.pattern.permute.xlu0 0
    %348 = vperm.xlu0 %347, %v273
    %v349 = vpop.permute.xlu0 %348
    %352 = vset.pattern.permute.xlu0 0
    %353 = vperm.xlu0 %352, %v274
    %v354 = vpop.permute.xlu0 %353
    %v357 = vlaneseq
    %v358 = vshrl.u32 %v357, 7
    %v359 = vsub.s32 0, %v358
    %v360 = vrot.slane %v275, %v359
    %v362 = vadd.f32 %v279, %v360
    %v363 = vadd.f32 %v284, %v360
    %v364 = vadd.f32 %v289, %v360
    %v365 = vadd.f32 %v294, %v360
    %v366 = vadd.f32 %v299, %v360
    %v367 = vadd.f32 %v304, %v360
    %v368 = vadd.f32 %v309, %v360
    %v369 = vadd.f32 %v314, %v360
    %v370 = vadd.f32 %v319, %v360
    %v371 = vadd.f32 %v324, %v360
    %v372 = vadd.f32 %v329, %v360
    %v373 = vadd.f32 %v334, %v360
    %v374 = vadd.f32 %v339, %v360
    %v375 = vadd.f32 %v344, %v360
    %v376 = vadd.f32 %v349, %v360
    %v377 = vadd.f32 %v354, %v360
    %v378 = vmul.f32 %v181, 2.0
    %v379 = vmul.f32 %v186, 2.0
    %v380 = vmul.f32 %v191, 2.0
    %v381 = vmul.f32 %v196, 2.0
    %v382 = vmul.f32 %v201, 2.0
    %v383 = vmul.f32 %v206, 2.0
    %v384 = vmul.f32 %v211, 2.0
    %v385 = vmul.f32 %v216, 2.0
    %v386 = vmul.f32 %v221, 2.0
    %v387 = vmul.f32 %v226, 2.0
    %v388 = vmul.f32 %v231, 2.0
    %v389 = vmul.f32 %v236, 2.0
    %v390 = vmul.f32 %v241, 2.0
    %v391 = vmul.f32 %v246, 2.0
    %v392 = vmul.f32 %v251, 2.0
    %v393 = vmul.f32 %v256, 2.0
    %v394 = vsub.f32 %v362, %v378
    %v395 = vsub.f32 %v363, %v379
    %v396 = vsub.f32 %v364, %v380
    %v397 = vsub.f32 %v365, %v381
    %v398 = vsub.f32 %v366, %v382
    %v399 = vsub.f32 %v367, %v383
    %v400 = vsub.f32 %v368, %v384
    %v401 = vsub.f32 %v369, %v385
    %v402 = vsub.f32 %v370, %v386
    %v403 = vsub.f32 %v371, %v387
    %v404 = vsub.f32 %v372, %v388
    %v405 = vsub.f32 %v373, %v389
    %v406 = vsub.f32 %v374, %v390
    %v407 = vsub.f32 %v375, %v391
    %v408 = vsub.f32 %v376, %v392
    %v409 = vsub.f32 %v377, %v393
    %v410 = vmax.f32 %v394, 1e-12
    %v411 = vmax.f32 %v395, 1e-12
    %v412 = vmax.f32 %v396, 1e-12
    %v413 = vmax.f32 %v397, 1e-12
    %v414 = vmax.f32 %v398, 1e-12
    %v415 = vmax.f32 %v399, 1e-12
    %v416 = vmax.f32 %v400, 1e-12
    %v417 = vmax.f32 %v401, 1e-12
    %v418 = vmax.f32 %v402, 1e-12
    %v419 = vmax.f32 %v403, 1e-12
    %v420 = vmax.f32 %v404, 1e-12
    %v421 = vmax.f32 %v405, 1e-12
    %v422 = vmax.f32 %v406, 1e-12
    %v423 = vmax.f32 %v407, 1e-12
    %v424 = vmax.f32 %v408, 1e-12
    %v425 = vmax.f32 %v409, 1e-12
    %v426 = vld [vmem:[%s2] sm:$0xff]
    %v427 = vld [vmem:[%s2 + $0x8] sm:$0xff]
    %v428 = vld [vmem:[%s2 + $0x10] sm:$0xff]
    %v429 = vld [vmem:[%s2 + $0x18] sm:$0xff]
    %v430 = vld [vmem:[%s2 + $0x20] sm:$0xff]
    %v431 = vld [vmem:[%s2 + $0x28] sm:$0xff]
    %v432 = vld [vmem:[%s2 + $0x30] sm:$0xff]
    %v433 = vld [vmem:[%s2 + $0x38] sm:$0xff]
    %v434 = vld [vmem:[%s2 + $0x40] sm:$0xff]
    %v435 = vld [vmem:[%s2 + $0x48] sm:$0xff]
    %v436 = vld [vmem:[%s2 + $0x50] sm:$0xff]
    %v437 = vld [vmem:[%s2 + $0x58] sm:$0xff]
    %v438 = vld [vmem:[%s2 + $0x60] sm:$0xff]
    %v439 = vld [vmem:[%s2 + $0x68] sm:$0xff]
    %v440 = vld [vmem:[%s2 + $0x70] sm:$0xff]
    %v441 = vld [vmem:[%s2 + $0x78] sm:$0xff]
    %v442 = vld [vmem:[%s3] sm:$0x3]
    %444 = vset.pattern.permute.xlu0 0
    %445 = vperm.xlu0 %444, %v426
    %v446 = vpop.permute.xlu0 %445
    %449 = vset.pattern.permute.xlu0 0
    %450 = vperm.xlu0 %449, %v427
    %v451 = vpop.permute.xlu0 %450
    %454 = vset.pattern.permute.xlu0 0
    %455 = vperm.xlu0 %454, %v428
    %v456 = vpop.permute.xlu0 %455
    %459 = vset.pattern.permute.xlu0 0
    %460 = vperm.xlu0 %459, %v429
    %v461 = vpop.permute.xlu0 %460
    %464 = vset.pattern.permute.xlu0 0
    %465 = vperm.xlu0 %464, %v430
    %v466 = vpop.permute.xlu0 %465
    %469 = vset.pattern.permute.xlu0 0
    %470 = vperm.xlu0 %469, %v431
    %v471 = vpop.permute.xlu0 %470
    %474 = vset.pattern.permute.xlu0 0
    %475 = vperm.xlu0 %474, %v432
    %v476 = vpop.permute.xlu0 %475
    %479 = vset.pattern.permute.xlu0 0
    %480 = vperm.xlu0 %479, %v433
    %v481 = vpop.permute.xlu0 %480
    %484 = vset.pattern.permute.xlu0 0
    %485 = vperm.xlu0 %484, %v434
    %v486 = vpop.permute.xlu0 %485
    %489 = vset.pattern.permute.xlu0 0
    %490 = vperm.xlu0 %489, %v435
    %v491 = vpop.permute.xlu0 %490
    %494 = vset.pattern.permute.xlu0 0
    %495 = vperm.xlu0 %494, %v436
    %v496 = vpop.permute.xlu0 %495
    %499 = vset.pattern.permute.xlu0 0
    %500 = vperm.xlu0 %499, %v437
    %v501 = vpop.permute.xlu0 %500
    %504 = vset.pattern.permute.xlu0 0
    %505 = vperm.xlu0 %504, %v438
    %v506 = vpop.permute.xlu0 %505
    %509 = vset.pattern.permute.xlu0 0
    %510 = vperm.xlu0 %509, %v439
    %v511 = vpop.permute.xlu0 %510
    %514 = vset.pattern.permute.xlu0 0
    %515 = vperm.xlu0 %514, %v440
    %v516 = vpop.permute.xlu0 %515
    %519 = vset.pattern.permute.xlu0 0
    %520 = vperm.xlu0 %519, %v441
    %v521 = vpop.permute.xlu0 %520
    %v523 = vlaneseq
    %v524 = vshrl.u32 %v523, 7
    %v525 = vsub.s32 0, %v524
    %v526 = vrot.slane %v442, %v525
    %v527 = vmul.f32 %v446, %v526
    %v528 = vmul.f32 %v451, %v526
    %v529 = vmul.f32 %v456, %v526
    %v530 = vmul.f32 %v461, %v526
    %v531 = vmul.f32 %v466, %v526
    %v532 = vmul.f32 %v471, %v526
    %v533 = vmul.f32 %v476, %v526
    %v534 = vmul.f32 %v481, %v526
    %v535 = vmul.f32 %v486, %v526
    %v536 = vmul.f32 %v491, %v526
    %v537 = vmul.f32 %v496, %v526
    %v538 = vmul.f32 %v501, %v526
    %v539 = vmul.f32 %v506, %v526
    %v540 = vmul.f32 %v511, %v526
    %v541 = vmul.f32 %v516, %v526
    %v542 = vmul.f32 %v521, %v526
    %543 = vset.pattern.permute.xlu0 1
    %544 = vperm.xlu0 %543, %v426
    %v545 = vpop.permute.xlu0 %544
    %547 = vset.pattern.permute.xlu0 1
    %548 = vperm.xlu0 %547, %v427
    %v549 = vpop.permute.xlu0 %548
    %551 = vset.pattern.permute.xlu0 1
    %552 = vperm.xlu0 %551, %v428
    %v553 = vpop.permute.xlu0 %552
    %555 = vset.pattern.permute.xlu0 1
    %556 = vperm.xlu0 %555, %v429
    %v557 = vpop.permute.xlu0 %556
    %559 = vset.pattern.permute.xlu0 1
    %560 = vperm.xlu0 %559, %v430
    %v561 = vpop.permute.xlu0 %560
    %563 = vset.pattern.permute.xlu0 1
    %564 = vperm.xlu0 %563, %v431
    %v565 = vpop.permute.xlu0 %564
    %567 = vset.pattern.permute.xlu0 1
    %568 = vperm.xlu0 %567, %v432
    %v569 = vpop.permute.xlu0 %568
    %571 = vset.pattern.permute.xlu0 1
    %572 = vperm.xlu0 %571, %v433
    %v573 = vpop.permute.xlu0 %572
    %575 = vset.pattern.permute.xlu0 1
    %576 = vperm.xlu0 %575, %v434
    %v577 = vpop.permute.xlu0 %576
    %579 = vset.pattern.permute.xlu0 1
    %580 = vperm.xlu0 %579, %v435
    %v581 = vpop.permute.xlu0 %580
    %583 = vset.pattern.permute.xlu0 1
    %584 = vperm.xlu0 %583, %v436
    %v585 = vpop.permute.xlu0 %584
    %587 = vset.pattern.permute.xlu0 1
    %588 = vperm.xlu0 %587, %v437
    %v589 = vpop.permute.xlu0 %588
    %591 = vset.pattern.permute.xlu0 1
    %592 = vperm.xlu0 %591, %v438
    %v593 = vpop.permute.xlu0 %592
    %595 = vset.pattern.permute.xlu0 1
    %596 = vperm.xlu0 %595, %v439
    %v597 = vpop.permute.xlu0 %596
    %599 = vset.pattern.permute.xlu0 1
    %600 = vperm.xlu0 %599, %v440
    %v601 = vpop.permute.xlu0 %600
    %603 = vset.pattern.permute.xlu0 1
    %604 = vperm.xlu0 %603, %v441
    %v605 = vpop.permute.xlu0 %604
    %v607 = vlaneseq
    %v608 = vshrl.u32 %v607, 7
    %v609 = vsub.s32 1, %v608
    %v610 = vrot.slane %v442, %v609
    %v611 = vmul.f32 %v545, %v610
    %v612 = vmul.f32 %v549, %v610
    %v613 = vmul.f32 %v553, %v610
    %v614 = vmul.f32 %v557, %v610
    %v615 = vmul.f32 %v561, %v610
    %v616 = vmul.f32 %v565, %v610
    %v617 = vmul.f32 %v569, %v610
    %v618 = vmul.f32 %v573, %v610
    %v619 = vmul.f32 %v577, %v610
    %v620 = vmul.f32 %v581, %v610
    %v621 = vmul.f32 %v585, %v610
    %v622 = vmul.f32 %v589, %v610
    %v623 = vmul.f32 %v593, %v610
    %v624 = vmul.f32 %v597, %v610
    %v625 = vmul.f32 %v601, %v610
    %v626 = vmul.f32 %v605, %v610
    %v627 = vadd.f32 %v527, %v611
    %v628 = vadd.f32 %v528, %v612
    %v629 = vadd.f32 %v529, %v613
    %v630 = vadd.f32 %v530, %v614
    %v631 = vadd.f32 %v531, %v615
    %v632 = vadd.f32 %v532, %v616
    %v633 = vadd.f32 %v533, %v617
    %v634 = vadd.f32 %v534, %v618
    %v635 = vadd.f32 %v535, %v619
    %v636 = vadd.f32 %v536, %v620
    %v637 = vadd.f32 %v537, %v621
    %v638 = vadd.f32 %v538, %v622
    %v639 = vadd.f32 %v539, %v623
    %v640 = vadd.f32 %v540, %v624
    %v641 = vadd.f32 %v541, %v625
    %v642 = vadd.f32 %v542, %v626
    %v643 = vld [vmem:[%s6] sm:$0xff]
    %v644 = vld [vmem:[%s6 + $0x8] sm:$0xff]
    %v645 = vld [vmem:[%s6 + $0x10] sm:$0xff]
    %v646 = vld [vmem:[%s6 + $0x18] sm:$0xff]
    %v647 = vld [vmem:[%s6 + $0x20] sm:$0xff]
    %v648 = vld [vmem:[%s6 + $0x28] sm:$0xff]
    %v649 = vld [vmem:[%s6 + $0x30] sm:$0xff]
    %v650 = vld [vmem:[%s6 + $0x38] sm:$0xff]
    %v651 = vld [vmem:[%s6 + $0x40] sm:$0xff]
    %v652 = vld [vmem:[%s6 + $0x48] sm:$0xff]
    %v653 = vld [vmem:[%s6 + $0x50] sm:$0xff]
    %v654 = vld [vmem:[%s6 + $0x58] sm:$0xff]
    %v655 = vld [vmem:[%s6 + $0x60] sm:$0xff]
    %v656 = vld [vmem:[%s6 + $0x68] sm:$0xff]
    %v657 = vld [vmem:[%s6 + $0x70] sm:$0xff]
    %v658 = vld [vmem:[%s6 + $0x78] sm:$0xff]
    %v659 = vld [vmem:[%s7] sm:$0x1]
    %661 = vset.pattern.permute.xlu0 0
    %662 = vperm.xlu0 %661, %v643
    %v663 = vpop.permute.xlu0 %662
    %666 = vset.pattern.permute.xlu0 0
    %667 = vperm.xlu0 %666, %v644
    %v668 = vpop.permute.xlu0 %667
    %671 = vset.pattern.permute.xlu0 0
    %672 = vperm.xlu0 %671, %v645
    %v673 = vpop.permute.xlu0 %672
    %676 = vset.pattern.permute.xlu0 0
    %677 = vperm.xlu0 %676, %v646
    %v678 = vpop.permute.xlu0 %677
    %681 = vset.pattern.permute.xlu0 0
    %682 = vperm.xlu0 %681, %v647
    %v683 = vpop.permute.xlu0 %682
    %686 = vset.pattern.permute.xlu0 0
    %687 = vperm.xlu0 %686, %v648
    %v688 = vpop.permute.xlu0 %687
    %691 = vset.pattern.permute.xlu0 0
    %692 = vperm.xlu0 %691, %v649
    %v693 = vpop.permute.xlu0 %692
    %696 = vset.pattern.permute.xlu0 0
    %697 = vperm.xlu0 %696, %v650
    %v698 = vpop.permute.xlu0 %697
    %701 = vset.pattern.permute.xlu0 0
    %702 = vperm.xlu0 %701, %v651
    %v703 = vpop.permute.xlu0 %702
    %706 = vset.pattern.permute.xlu0 0
    %707 = vperm.xlu0 %706, %v652
    %v708 = vpop.permute.xlu0 %707
    %711 = vset.pattern.permute.xlu0 0
    %712 = vperm.xlu0 %711, %v653
    %v713 = vpop.permute.xlu0 %712
    %716 = vset.pattern.permute.xlu0 0
    %717 = vperm.xlu0 %716, %v654
    %v718 = vpop.permute.xlu0 %717
    %721 = vset.pattern.permute.xlu0 0
    %722 = vperm.xlu0 %721, %v655
    %v723 = vpop.permute.xlu0 %722
    %726 = vset.pattern.permute.xlu0 0
    %727 = vperm.xlu0 %726, %v656
    %v728 = vpop.permute.xlu0 %727
    %731 = vset.pattern.permute.xlu0 0
    %732 = vperm.xlu0 %731, %v657
    %v733 = vpop.permute.xlu0 %732
    %736 = vset.pattern.permute.xlu0 0
    %737 = vperm.xlu0 %736, %v658
    %v738 = vpop.permute.xlu0 %737
    %v741 = vlaneseq
    %v742 = vshrl.u32 %v741, 7
    %v743 = vsub.s32 0, %v742
    %v744 = vrot.slane %v659, %v743
    %v746 = vadd.f32 %v663, %v744
    %v747 = vadd.f32 %v668, %v744
    %v748 = vadd.f32 %v673, %v744
    %v749 = vadd.f32 %v678, %v744
    %v750 = vadd.f32 %v683, %v744
    %v751 = vadd.f32 %v688, %v744
    %v752 = vadd.f32 %v693, %v744
    %v753 = vadd.f32 %v698, %v744
    %v754 = vadd.f32 %v703, %v744
    %v755 = vadd.f32 %v708, %v744
    %v756 = vadd.f32 %v713, %v744
    %v757 = vadd.f32 %v718, %v744
    %v758 = vadd.f32 %v723, %v744
    %v759 = vadd.f32 %v728, %v744
    %v760 = vadd.f32 %v733, %v744
    %v761 = vadd.f32 %v738, %v744
    %v762 = vmul.f32 %v627, 2.0
    %v763 = vmul.f32 %v628, 2.0
    %v764 = vmul.f32 %v629, 2.0
    %v765 = vmul.f32 %v630, 2.0
    %v766 = vmul.f32 %v631, 2.0
    %v767 = vmul.f32 %v632, 2.0
    %v768 = vmul.f32 %v633, 2.0
    %v769 = vmul.f32 %v634, 2.0
    %v770 = vmul.f32 %v635, 2.0
    %v771 = vmul.f32 %v636, 2.0
    %v772 = vmul.f32 %v637, 2.0
    %v773 = vmul.f32 %v638, 2.0
    %v774 = vmul.f32 %v639, 2.0
    %v775 = vmul.f32 %v640, 2.0
    %v776 = vmul.f32 %v641, 2.0
    %v777 = vmul.f32 %v642, 2.0
    %v778 = vsub.f32 %v746, %v762
    %v779 = vsub.f32 %v747, %v763
    %v780 = vsub.f32 %v748, %v764
    %v781 = vsub.f32 %v749, %v765
    %v782 = vsub.f32 %v750, %v766
    %v783 = vsub.f32 %v751, %v767
    %v784 = vsub.f32 %v752, %v768
    %v785 = vsub.f32 %v753, %v769
    %v786 = vsub.f32 %v754, %v770
    %v787 = vsub.f32 %v755, %v771
    %v788 = vsub.f32 %v756, %v772
    %v789 = vsub.f32 %v757, %v773
    %v790 = vsub.f32 %v758, %v774
    %v791 = vsub.f32 %v759, %v775
    %v792 = vsub.f32 %v760, %v776
    %v793 = vsub.f32 %v761, %v777
    %v794 = vmax.f32 %v778, 1e-12
    %v795 = vmax.f32 %v779, 1e-12
    %v796 = vmax.f32 %v780, 1e-12
    %v797 = vmax.f32 %v781, 1e-12
    %v798 = vmax.f32 %v782, 1e-12
    %v799 = vmax.f32 %v783, 1e-12
    %v800 = vmax.f32 %v784, 1e-12
    %v801 = vmax.f32 %v785, 1e-12
    %v802 = vmax.f32 %v786, 1e-12
    %v803 = vmax.f32 %v787, 1e-12
    %v804 = vmax.f32 %v788, 1e-12
    %v805 = vmax.f32 %v789, 1e-12
    %v806 = vmax.f32 %v790, 1e-12
    %v807 = vmax.f32 %v791, 1e-12
    %v808 = vmax.f32 %v792, 1e-12
    %v809 = vmax.f32 %v793, 1e-12
    %v810 = vld [vmem:[%s8] sm:$0x1]
    %v812 = vlaneseq
    %v813 = vshrl.u32 %v812, 7
    %v814 = vsub.s32 0, %v813
    %v815 = vrot.slane %v810, %v814
    %v817 = vsub.f32 %v410, %v815
    %v818 = vsub.f32 %v411, %v815
    %v819 = vsub.f32 %v412, %v815
    %v820 = vsub.f32 %v413, %v815
    %v821 = vsub.f32 %v414, %v815
    %v822 = vsub.f32 %v415, %v815
    %v823 = vsub.f32 %v416, %v815
    %v824 = vsub.f32 %v417, %v815
    %v825 = vsub.f32 %v418, %v815
    %v826 = vsub.f32 %v419, %v815
    %v827 = vsub.f32 %v420, %v815
    %v828 = vsub.f32 %v421, %v815
    %v829 = vsub.f32 %v422, %v815
    %v830 = vsub.f32 %v423, %v815
    %v831 = vsub.f32 %v424, %v815
    %v832 = vsub.f32 %v425, %v815
    %v833 = vld [vmem:[%s10] sm:$0x1]
    %v835 = vlaneseq
    %v836 = vshrl.u32 %v835, 7
    %v837 = vsub.s32 0, %v836
    %v838 = vrot.slane %v833, %v837
    %v840 = vmul.f32 %v817, %v838
    %v841 = vmul.f32 %v818, %v838
    %v842 = vmul.f32 %v819, %v838
    %v843 = vmul.f32 %v820, %v838
    %v844 = vmul.f32 %v821, %v838
    %v845 = vmul.f32 %v822, %v838
    %v846 = vmul.f32 %v823, %v838
    %v847 = vmul.f32 %v824, %v838
    %v848 = vmul.f32 %v825, %v838
    %v849 = vmul.f32 %v826, %v838
    %v850 = vmul.f32 %v827, %v838
    %v851 = vmul.f32 %v828, %v838
    %v852 = vmul.f32 %v829, %v838
    %v853 = vmul.f32 %v830, %v838
    %v854 = vmul.f32 %v831, %v838
    %v855 = vmul.f32 %v832, %v838
    %v856 = vmax.f32 %v840, 0.0
    %v857 = vmax.f32 %v841, 0.0
    %v858 = vmax.f32 %v842, 0.0
    %v859 = vmax.f32 %v843, 0.0
    %v860 = vmax.f32 %v844, 0.0
    %v861 = vmax.f32 %v845, 0.0
    %v862 = vmax.f32 %v846, 0.0
    %v863 = vmax.f32 %v847, 0.0
    %v864 = vmax.f32 %v848, 0.0
    %v865 = vmax.f32 %v849, 0.0
    %v866 = vmax.f32 %v850, 0.0
    %v867 = vmax.f32 %v851, 0.0
    %v868 = vmax.f32 %v852, 0.0
    %v869 = vmax.f32 %v853, 0.0
    %v870 = vmax.f32 %v854, 0.0
    %v871 = vmax.f32 %v855, 0.0
    %v872 = vld [vmem:[%s9] sm:$0xff]
    %v873 = vld [vmem:[%s9 + $0x8] sm:$0xff]
    %v874 = vld [vmem:[%s9 + $0x10] sm:$0xff]
    %v875 = vld [vmem:[%s9 + $0x18] sm:$0xff]
    %v876 = vld [vmem:[%s9 + $0x20] sm:$0xff]
    %v877 = vld [vmem:[%s9 + $0x28] sm:$0xff]
    %v878 = vld [vmem:[%s9 + $0x30] sm:$0xff]
    %v879 = vld [vmem:[%s9 + $0x38] sm:$0xff]
    %v880 = vld [vmem:[%s9 + $0x40] sm:$0xff]
    %v881 = vld [vmem:[%s9 + $0x48] sm:$0xff]
    %v882 = vld [vmem:[%s9 + $0x50] sm:$0xff]
    %v883 = vld [vmem:[%s9 + $0x58] sm:$0xff]
    %v884 = vld [vmem:[%s9 + $0x60] sm:$0xff]
    %v885 = vld [vmem:[%s9 + $0x68] sm:$0xff]
    %v886 = vld [vmem:[%s9 + $0x70] sm:$0xff]
    %v887 = vld [vmem:[%s9 + $0x78] sm:$0xff]
    %889 = vset.pattern.permute.xlu0 0
    %890 = vperm.xlu0 %889, %v872
    %v891 = vpop.permute.xlu0 %890
    %894 = vset.pattern.permute.xlu0 0
    %895 = vperm.xlu0 %894, %v873
    %v896 = vpop.permute.xlu0 %895
    %899 = vset.pattern.permute.xlu0 0
    %900 = vperm.xlu0 %899, %v874
    %v901 = vpop.permute.xlu0 %900
    %904 = vset.pattern.permute.xlu0 0
    %905 = vperm.xlu0 %904, %v875
    %v906 = vpop.permute.xlu0 %905
    %909 = vset.pattern.permute.xlu0 0
    %910 = vperm.xlu0 %909, %v876
    %v911 = vpop.permute.xlu0 %910
    %914 = vset.pattern.permute.xlu0 0
    %915 = vperm.xlu0 %914, %v877
    %v916 = vpop.permute.xlu0 %915
    %919 = vset.pattern.permute.xlu0 0
    %920 = vperm.xlu0 %919, %v878
    %v921 = vpop.permute.xlu0 %920
    %924 = vset.pattern.permute.xlu0 0
    %925 = vperm.xlu0 %924, %v879
    %v926 = vpop.permute.xlu0 %925
    %929 = vset.pattern.permute.xlu0 0
    %930 = vperm.xlu0 %929, %v880
    %v931 = vpop.permute.xlu0 %930
    %934 = vset.pattern.permute.xlu0 0
    %935 = vperm.xlu0 %934, %v881
    %v936 = vpop.permute.xlu0 %935
    %939 = vset.pattern.permute.xlu0 0
    %940 = vperm.xlu0 %939, %v882
    %v941 = vpop.permute.xlu0 %940
    %944 = vset.pattern.permute.xlu0 0
    %945 = vperm.xlu0 %944, %v883
    %v946 = vpop.permute.xlu0 %945
    %949 = vset.pattern.permute.xlu0 0
    %950 = vperm.xlu0 %949, %v884
    %v951 = vpop.permute.xlu0 %950
    %954 = vset.pattern.permute.xlu0 0
    %955 = vperm.xlu0 %954, %v885
    %v956 = vpop.permute.xlu0 %955
    %959 = vset.pattern.permute.xlu0 0
    %960 = vperm.xlu0 %959, %v886
    %v961 = vpop.permute.xlu0 %960
    %964 = vset.pattern.permute.xlu0 0
    %965 = vperm.xlu0 %964, %v887
    %v966 = vpop.permute.xlu0 %965
    %v968 = vsub.f32 %v410, %v891
    %v969 = vsub.f32 %v411, %v896
    %v970 = vsub.f32 %v412, %v901
    %v971 = vsub.f32 %v413, %v906
    %v972 = vsub.f32 %v414, %v911
    %v973 = vsub.f32 %v415, %v916
    %v974 = vsub.f32 %v416, %v921
    %v975 = vsub.f32 %v417, %v926
    %v976 = vsub.f32 %v418, %v931
    %v977 = vsub.f32 %v419, %v936
    %v978 = vsub.f32 %v420, %v941
    %v979 = vsub.f32 %v421, %v946
    %v980 = vsub.f32 %v422, %v951
    %v981 = vsub.f32 %v423, %v956
    %v982 = vsub.f32 %v424, %v961
    %v983 = vsub.f32 %v425, %v966
    %v984 = vld [vmem:[%s11] sm:$0xff]
    %v985 = vld [vmem:[%s11 + $0x8] sm:$0xff]
    %v986 = vld [vmem:[%s11 + $0x10] sm:$0xff]
    %v987 = vld [vmem:[%s11 + $0x18] sm:$0xff]
    %v988 = vld [vmem:[%s11 + $0x20] sm:$0xff]
    %v989 = vld [vmem:[%s11 + $0x28] sm:$0xff]
    %v990 = vld [vmem:[%s11 + $0x30] sm:$0xff]
    %v991 = vld [vmem:[%s11 + $0x38] sm:$0xff]
    %v992 = vld [vmem:[%s11 + $0x40] sm:$0xff]
    %v993 = vld [vmem:[%s11 + $0x48] sm:$0xff]
    %v994 = vld [vmem:[%s11 + $0x50] sm:$0xff]
    %v995 = vld [vmem:[%s11 + $0x58] sm:$0xff]
    %v996 = vld [vmem:[%s11 + $0x60] sm:$0xff]
    %v997 = vld [vmem:[%s11 + $0x68] sm:$0xff]
    %v998 = vld [vmem:[%s11 + $0x70] sm:$0xff]
    %v999 = vld [vmem:[%s11 + $0x78] sm:$0xff]
    %1001 = vset.pattern.permute.xlu0 0
    %1002 = vperm.xlu0 %1001, %v984
    %v1003 = vpop.permute.xlu0 %1002
    %1006 = vset.pattern.permute.xlu0 0
    %1007 = vperm.xlu0 %1006, %v985
    %v1008 = vpop.permute.xlu0 %1007
    %1011 = vset.pattern.permute.xlu0 0
    %1012 = vperm.xlu0 %1011, %v986
    %v1013 = vpop.permute.xlu0 %1012
    %1016 = vset.pattern.permute.xlu0 0
    %1017 = vperm.xlu0 %1016, %v987
    %v1018 = vpop.permute.xlu0 %1017
    %1021 = vset.pattern.permute.xlu0 0
    %1022 = vperm.xlu0 %1021, %v988
    %v1023 = vpop.permute.xlu0 %1022
    %1026 = vset.pattern.permute.xlu0 0
    %1027 = vperm.xlu0 %1026, %v989
    %v1028 = vpop.permute.xlu0 %1027
    %1031 = vset.pattern.permute.xlu0 0
    %1032 = vperm.xlu0 %1031, %v990
    %v1033 = vpop.permute.xlu0 %1032
    %1036 = vset.pattern.permute.xlu0 0
    %1037 = vperm.xlu0 %1036, %v991
    %v1038 = vpop.permute.xlu0 %1037
    %1041 = vset.pattern.permute.xlu0 0
    %1042 = vperm.xlu0 %1041, %v992
    %v1043 = vpop.permute.xlu0 %1042
    %1046 = vset.pattern.permute.xlu0 0
    %1047 = vperm.xlu0 %1046, %v993
    %v1048 = vpop.permute.xlu0 %1047
    %1051 = vset.pattern.permute.xlu0 0
    %1052 = vperm.xlu0 %1051, %v994
    %v1053 = vpop.permute.xlu0 %1052
    %1056 = vset.pattern.permute.xlu0 0
    %1057 = vperm.xlu0 %1056, %v995
    %v1058 = vpop.permute.xlu0 %1057
    %1061 = vset.pattern.permute.xlu0 0
    %1062 = vperm.xlu0 %1061, %v996
    %v1063 = vpop.permute.xlu0 %1062
    %1066 = vset.pattern.permute.xlu0 0
    %1067 = vperm.xlu0 %1066, %v997
    %v1068 = vpop.permute.xlu0 %1067
    %1071 = vset.pattern.permute.xlu0 0
    %1072 = vperm.xlu0 %1071, %v998
    %v1073 = vpop.permute.xlu0 %1072
    %1076 = vset.pattern.permute.xlu0 0
    %1077 = vperm.xlu0 %1076, %v999
    %v1078 = vpop.permute.xlu0 %1077
    %v1080 = vmul.f32 %v968, %v1003
    %v1081 = vmul.f32 %v969, %v1008
    %v1082 = vmul.f32 %v970, %v1013
    %v1083 = vmul.f32 %v971, %v1018
    %v1084 = vmul.f32 %v972, %v1023
    %v1085 = vmul.f32 %v973, %v1028
    %v1086 = vmul.f32 %v974, %v1033
    %v1087 = vmul.f32 %v975, %v1038
    %v1088 = vmul.f32 %v976, %v1043
    %v1089 = vmul.f32 %v977, %v1048
    %v1090 = vmul.f32 %v978, %v1053
    %v1091 = vmul.f32 %v979, %v1058
    %v1092 = vmul.f32 %v980, %v1063
    %v1093 = vmul.f32 %v981, %v1068
    %v1094 = vmul.f32 %v982, %v1073
    %v1095 = vmul.f32 %v983, %v1078
    %v1096 = vmax.f32 %v1080, 0.0
    %v1097 = vmax.f32 %v1081, 0.0
    %v1098 = vmax.f32 %v1082, 0.0
    %v1099 = vmax.f32 %v1083, 0.0
    %v1100 = vmax.f32 %v1084, 0.0
    %v1101 = vmax.f32 %v1085, 0.0
    %v1102 = vmax.f32 %v1086, 0.0
    %v1103 = vmax.f32 %v1087, 0.0
    %v1104 = vmax.f32 %v1088, 0.0
    %v1105 = vmax.f32 %v1089, 0.0
    %v1106 = vmax.f32 %v1090, 0.0
    %v1107 = vmax.f32 %v1091, 0.0
    %v1108 = vmax.f32 %v1092, 0.0
    %v1109 = vmax.f32 %v1093, 0.0
    %v1110 = vmax.f32 %v1094, 0.0
    %v1111 = vmax.f32 %v1095, 0.0
    %v1112 = vmul.f32 %v856, 0.01
    %v1113 = vmul.f32 %v857, 0.01
    %v1114 = vmul.f32 %v858, 0.01
    %v1115 = vmul.f32 %v859, 0.01
    %v1116 = vmul.f32 %v860, 0.01
    %v1117 = vmul.f32 %v861, 0.01
    %v1118 = vmul.f32 %v862, 0.01
    %v1119 = vmul.f32 %v863, 0.01
    %v1120 = vmul.f32 %v864, 0.01
    %v1121 = vmul.f32 %v865, 0.01
    %v1122 = vmul.f32 %v866, 0.01
    %v1123 = vmul.f32 %v867, 0.01
    %v1124 = vmul.f32 %v868, 0.01
    %v1125 = vmul.f32 %v869, 0.01
    %v1126 = vmul.f32 %v870, 0.01
    %v1127 = vmul.f32 %v871, 0.01
    %v1128 = vadd.f32 %v1112, 1.0
    %v1129 = vadd.f32 %v1113, 1.0
    %v1130 = vadd.f32 %v1114, 1.0
    %v1131 = vadd.f32 %v1115, 1.0
    %v1132 = vadd.f32 %v1116, 1.0
    %v1133 = vadd.f32 %v1117, 1.0
    %v1134 = vadd.f32 %v1118, 1.0
    %v1135 = vadd.f32 %v1119, 1.0
    %v1136 = vadd.f32 %v1120, 1.0
    %v1137 = vadd.f32 %v1121, 1.0
    %v1138 = vadd.f32 %v1122, 1.0
    %v1139 = vadd.f32 %v1123, 1.0
    %v1140 = vadd.f32 %v1124, 1.0
    %v1141 = vadd.f32 %v1125, 1.0
    %v1142 = vadd.f32 %v1126, 1.0
    %v1143 = vadd.f32 %v1127, 1.0
    %v1144 = vmul.f32 %v1128, %v1128
    %v1145 = vmul.f32 %v1129, %v1129
    %v1146 = vmul.f32 %v1130, %v1130
    %v1147 = vmul.f32 %v1131, %v1131
    %v1148 = vmul.f32 %v1132, %v1132
    %v1149 = vmul.f32 %v1133, %v1133
    %v1150 = vmul.f32 %v1134, %v1134
    %v1151 = vmul.f32 %v1135, %v1135
    %v1152 = vmul.f32 %v1136, %v1136
    %v1153 = vmul.f32 %v1137, %v1137
    %v1154 = vmul.f32 %v1138, %v1138
    %v1155 = vmul.f32 %v1139, %v1139
    %v1156 = vmul.f32 %v1140, %v1140
    %v1157 = vmul.f32 %v1141, %v1141
    %v1158 = vmul.f32 %v1142, %v1142
    %v1159 = vmul.f32 %v1143, %v1143
    %v1160 = vmul.f32 %v1144, %v1144
    %v1161 = vmul.f32 %v1145, %v1145
    %v1162 = vmul.f32 %v1146, %v1146
    %v1163 = vmul.f32 %v1147, %v1147
    %v1164 = vmul.f32 %v1148, %v1148
    %v1165 = vmul.f32 %v1149, %v1149
    %v1166 = vmul.f32 %v1150, %v1150
    %v1167 = vmul.f32 %v1151, %v1151
    %v1168 = vmul.f32 %v1152, %v1152
    %v1169 = vmul.f32 %v1153, %v1153
    %v1170 = vmul.f32 %v1154, %v1154
    %v1171 = vmul.f32 %v1155, %v1155
    %v1172 = vmul.f32 %v1156, %v1156
    %v1173 = vmul.f32 %v1157, %v1157
    %v1174 = vmul.f32 %v1158, %v1158
    %v1175 = vmul.f32 %v1159, %v1159
    %v1176 = vmul.f32 %v1128, %v1160
    %v1177 = vmul.f32 %v1129, %v1161
    %v1178 = vmul.f32 %v1130, %v1162
    %v1179 = vmul.f32 %v1131, %v1163
    %v1180 = vmul.f32 %v1132, %v1164
    %v1181 = vmul.f32 %v1133, %v1165
    %v1182 = vmul.f32 %v1134, %v1166
    %v1183 = vmul.f32 %v1135, %v1167
    %v1184 = vmul.f32 %v1136, %v1168
    %v1185 = vmul.f32 %v1137, %v1169
    %v1186 = vmul.f32 %v1138, %v1170
    %v1187 = vmul.f32 %v1139, %v1171
    %v1188 = vmul.f32 %v1140, %v1172
    %v1189 = vmul.f32 %v1141, %v1173
    %v1190 = vmul.f32 %v1142, %v1174
    %v1191 = vmul.f32 %v1143, %v1175
    %v1192 = vmul.f32 %v1160, %v1160
    %v1193 = vmul.f32 %v1161, %v1161
    %v1194 = vmul.f32 %v1162, %v1162
    %v1195 = vmul.f32 %v1163, %v1163
    %v1196 = vmul.f32 %v1164, %v1164
    %v1197 = vmul.f32 %v1165, %v1165
    %v1198 = vmul.f32 %v1166, %v1166
    %v1199 = vmul.f32 %v1167, %v1167
    %v1200 = vmul.f32 %v1168, %v1168
    %v1201 = vmul.f32 %v1169, %v1169
    %v1202 = vmul.f32 %v1170, %v1170
    %v1203 = vmul.f32 %v1171, %v1171
    %v1204 = vmul.f32 %v1172, %v1172
    %v1205 = vmul.f32 %v1173, %v1173
    %v1206 = vmul.f32 %v1174, %v1174
    %v1207 = vmul.f32 %v1175, %v1175
    %v1208 = vmul.f32 %v1192, %v1192
    %v1209 = vmul.f32 %v1193, %v1193
    %v1210 = vmul.f32 %v1194, %v1194
    %v1211 = vmul.f32 %v1195, %v1195
    %v1212 = vmul.f32 %v1196, %v1196
    %v1213 = vmul.f32 %v1197, %v1197
    %v1214 = vmul.f32 %v1198, %v1198
    %v1215 = vmul.f32 %v1199, %v1199
    %v1216 = vmul.f32 %v1200, %v1200
    %v1217 = vmul.f32 %v1201, %v1201
    %v1218 = vmul.f32 %v1202, %v1202
    %v1219 = vmul.f32 %v1203, %v1203
    %v1220 = vmul.f32 %v1204, %v1204
    %v1221 = vmul.f32 %v1205, %v1205
    %v1222 = vmul.f32 %v1206, %v1206
    %v1223 = vmul.f32 %v1207, %v1207
    %v1224 = vmul.f32 %v1208, %v1208
    %v1225 = vmul.f32 %v1209, %v1209
    %v1226 = vmul.f32 %v1210, %v1210
    %v1227 = vmul.f32 %v1211, %v1211
    %v1228 = vmul.f32 %v1212, %v1212
    %v1229 = vmul.f32 %v1213, %v1213
    %v1230 = vmul.f32 %v1214, %v1214
    %v1231 = vmul.f32 %v1215, %v1215
    %v1232 = vmul.f32 %v1216, %v1216
    %v1233 = vmul.f32 %v1217, %v1217
    %v1234 = vmul.f32 %v1218, %v1218
    %v1235 = vmul.f32 %v1219, %v1219
    %v1236 = vmul.f32 %v1220, %v1220
    %v1237 = vmul.f32 %v1221, %v1221
    %v1238 = vmul.f32 %v1222, %v1222
    %v1239 = vmul.f32 %v1223, %v1223
    %v1240 = vmul.f32 %v1176, %v1224
    %v1241 = vmul.f32 %v1177, %v1225
    %v1242 = vmul.f32 %v1178, %v1226
    %v1243 = vmul.f32 %v1179, %v1227
    %v1244 = vmul.f32 %v1180, %v1228
    %v1245 = vmul.f32 %v1181, %v1229
    %v1246 = vmul.f32 %v1182, %v1230
    %v1247 = vmul.f32 %v1183, %v1231
    %v1248 = vmul.f32 %v1184, %v1232
    %v1249 = vmul.f32 %v1185, %v1233
    %v1250 = vmul.f32 %v1186, %v1234
    %v1251 = vmul.f32 %v1187, %v1235
    %v1252 = vmul.f32 %v1188, %v1236
    %v1253 = vmul.f32 %v1189, %v1237
    %v1254 = vmul.f32 %v1190, %v1238
    %v1255 = vmul.f32 %v1191, %v1239
    %v1256 = vmul.f32 %v1224, %v1224
    %v1257 = vmul.f32 %v1225, %v1225
    %v1258 = vmul.f32 %v1226, %v1226
    %v1259 = vmul.f32 %v1227, %v1227
    %v1260 = vmul.f32 %v1228, %v1228
    %v1261 = vmul.f32 %v1229, %v1229
    %v1262 = vmul.f32 %v1230, %v1230
    %v1263 = vmul.f32 %v1231, %v1231
    %v1264 = vmul.f32 %v1232, %v1232
    %v1265 = vmul.f32 %v1233, %v1233
    %v1266 = vmul.f32 %v1234, %v1234
    %v1267 = vmul.f32 %v1235, %v1235
    %v1268 = vmul.f32 %v1236, %v1236
    %v1269 = vmul.f32 %v1237, %v1237
    %v1270 = vmul.f32 %v1238, %v1238
    %v1271 = vmul.f32 %v1239, %v1239
    %v1272 = vmul.f32 %v1240, %v1256
    %v1273 = vmul.f32 %v1241, %v1257
    %v1274 = vmul.f32 %v1242, %v1258
    %v1275 = vmul.f32 %v1243, %v1259
    %v1276 = vmul.f32 %v1244, %v1260
    %v1277 = vmul.f32 %v1245, %v1261
    %v1278 = vmul.f32 %v1246, %v1262
    %v1279 = vmul.f32 %v1247, %v1263
    %v1280 = vmul.f32 %v1248, %v1264
    %v1281 = vmul.f32 %v1249, %v1265
    %v1282 = vmul.f32 %v1250, %v1266
    %v1283 = vmul.f32 %v1251, %v1267
    %v1284 = vmul.f32 %v1252, %v1268
    %v1285 = vmul.f32 %v1253, %v1269
    %v1286 = vmul.f32 %v1254, %v1270
    %v1287 = vmul.f32 %v1255, %v1271
    %v1288 = vmin.f32 %v1272, 3e+38
    %v1289 = vmin.f32 %v1273, 3e+38
    %v1290 = vmin.f32 %v1274, 3e+38
    %v1291 = vmin.f32 %v1275, 3e+38
    %v1292 = vmin.f32 %v1276, 3e+38
    %v1293 = vmin.f32 %v1277, 3e+38
    %v1294 = vmin.f32 %v1278, 3e+38
    %v1295 = vmin.f32 %v1279, 3e+38
    %v1296 = vmin.f32 %v1280, 3e+38
    %v1297 = vmin.f32 %v1281, 3e+38
    %v1298 = vmin.f32 %v1282, 3e+38
    %v1299 = vmin.f32 %v1283, 3e+38
    %v1300 = vmin.f32 %v1284, 3e+38
    %v1301 = vmin.f32 %v1285, 3e+38
    %v1302 = vmin.f32 %v1286, 3e+38
    %v1303 = vmin.f32 %v1287, 3e+38
    %v1304 = vrcp.pop %v1288
    %v1305 = vrcp.pop %v1289
    %v1306 = vrcp.pop %v1290
    %v1307 = vrcp.pop %v1291
    %v1308 = vrcp.pop %v1292
    %v1309 = vrcp.pop %v1293
    %v1310 = vrcp.pop %v1294
    %v1311 = vrcp.pop %v1295
    %v1312 = vrcp.pop %v1296
    %v1313 = vrcp.pop %v1297
    %v1314 = vrcp.pop %v1298
    %v1315 = vrcp.pop %v1299
    %v1316 = vrcp.pop %v1300
    %v1317 = vrcp.pop %v1301
    %v1318 = vrcp.pop %v1302
    %v1319 = vrcp.pop %v1303
    %v1320 = vmul.f32 %v1288, %v1304
    %v1321 = vmul.f32 %v1289, %v1305
    %v1322 = vmul.f32 %v1290, %v1306
    %v1323 = vmul.f32 %v1291, %v1307
    %v1324 = vmul.f32 %v1292, %v1308
    %v1325 = vmul.f32 %v1293, %v1309
    %v1326 = vmul.f32 %v1294, %v1310
    %v1327 = vmul.f32 %v1295, %v1311
    %v1328 = vmul.f32 %v1296, %v1312
    %v1329 = vmul.f32 %v1297, %v1313
    %v1330 = vmul.f32 %v1298, %v1314
    %v1331 = vmul.f32 %v1299, %v1315
    %v1332 = vmul.f32 %v1300, %v1316
    %v1333 = vmul.f32 %v1301, %v1317
    %v1334 = vmul.f32 %v1302, %v1318
    %v1335 = vmul.f32 %v1303, %v1319
    %v1336 = vsub.f32 2.0, %v1320
    %v1337 = vsub.f32 2.0, %v1321
    %v1338 = vsub.f32 2.0, %v1322
    %v1339 = vsub.f32 2.0, %v1323
    %v1340 = vsub.f32 2.0, %v1324
    %v1341 = vsub.f32 2.0, %v1325
    %v1342 = vsub.f32 2.0, %v1326
    %v1343 = vsub.f32 2.0, %v1327
    %v1344 = vsub.f32 2.0, %v1328
    %v1345 = vsub.f32 2.0, %v1329
    %v1346 = vsub.f32 2.0, %v1330
    %v1347 = vsub.f32 2.0, %v1331
    %v1348 = vsub.f32 2.0, %v1332
    %v1349 = vsub.f32 2.0, %v1333
    %v1350 = vsub.f32 2.0, %v1334
    %v1351 = vsub.f32 2.0, %v1335
    %v1352 = vmul.f32 %v1304, %v1336
    %v1353 = vmul.f32 %v1305, %v1337
    %v1354 = vmul.f32 %v1306, %v1338
    %v1355 = vmul.f32 %v1307, %v1339
    %v1356 = vmul.f32 %v1308, %v1340
    %v1357 = vmul.f32 %v1309, %v1341
    %v1358 = vmul.f32 %v1310, %v1342
    %v1359 = vmul.f32 %v1311, %v1343
    %v1360 = vmul.f32 %v1312, %v1344
    %v1361 = vmul.f32 %v1313, %v1345
    %v1362 = vmul.f32 %v1314, %v1346
    %v1363 = vmul.f32 %v1315, %v1347
    %v1364 = vmul.f32 %v1316, %v1348
    %v1365 = vmul.f32 %v1317, %v1349
    %v1366 = vmul.f32 %v1318, %v1350
    %v1367 = vmul.f32 %v1319, %v1351
    %v1368 = vmul.f32 %v1352, 0.99450815
    %v1369 = vmul.f32 %v1353, 0.99450815
    %v1370 = vmul.f32 %v1354, 0.99450815
    %v1371 = vmul.f32 %v1355, 0.99450815
    %v1372 = vmul.f32 %v1356, 0.99450815
    %v1373 = vmul.f32 %v1357, 0.99450815
    %v1374 = vmul.f32 %v1358, 0.99450815
    %v1375 = vmul.f32 %v1359, 0.99450815
    %v1376 = vmul.f32 %v1360, 0.99450815
    %v1377 = vmul.f32 %v1361, 0.99450815
    %v1378 = vmul.f32 %v1362, 0.99450815
    %v1379 = vmul.f32 %v1363, 0.99450815
    %v1380 = vmul.f32 %v1364, 0.99450815
    %v1381 = vmul.f32 %v1365, 0.99450815
    %v1382 = vmul.f32 %v1366, 0.99450815
    %v1383 = vmul.f32 %v1367, 0.99450815
    %v1384 = vmul.f32 %v1096, 0.01
    %v1385 = vmul.f32 %v1097, 0.01
    %v1386 = vmul.f32 %v1098, 0.01
    %v1387 = vmul.f32 %v1099, 0.01
    %v1388 = vmul.f32 %v1100, 0.01
    %v1389 = vmul.f32 %v1101, 0.01
    %v1390 = vmul.f32 %v1102, 0.01
    %v1391 = vmul.f32 %v1103, 0.01
    %v1392 = vmul.f32 %v1104, 0.01
    %v1393 = vmul.f32 %v1105, 0.01
    %v1394 = vmul.f32 %v1106, 0.01
    %v1395 = vmul.f32 %v1107, 0.01
    %v1396 = vmul.f32 %v1108, 0.01
    %v1397 = vmul.f32 %v1109, 0.01
    %v1398 = vmul.f32 %v1110, 0.01
    %v1399 = vmul.f32 %v1111, 0.01
    %v1400 = vadd.f32 %v1384, 1.0
    %v1401 = vadd.f32 %v1385, 1.0
    %v1402 = vadd.f32 %v1386, 1.0
    %v1403 = vadd.f32 %v1387, 1.0
    %v1404 = vadd.f32 %v1388, 1.0
    %v1405 = vadd.f32 %v1389, 1.0
    %v1406 = vadd.f32 %v1390, 1.0
    %v1407 = vadd.f32 %v1391, 1.0
    %v1408 = vadd.f32 %v1392, 1.0
    %v1409 = vadd.f32 %v1393, 1.0
    %v1410 = vadd.f32 %v1394, 1.0
    %v1411 = vadd.f32 %v1395, 1.0
    %v1412 = vadd.f32 %v1396, 1.0
    %v1413 = vadd.f32 %v1397, 1.0
    %v1414 = vadd.f32 %v1398, 1.0
    %v1415 = vadd.f32 %v1399, 1.0
    %v1416 = vmul.f32 %v1400, %v1400
    %v1417 = vmul.f32 %v1401, %v1401
    %v1418 = vmul.f32 %v1402, %v1402
    %v1419 = vmul.f32 %v1403, %v1403
    %v1420 = vmul.f32 %v1404, %v1404
    %v1421 = vmul.f32 %v1405, %v1405
    %v1422 = vmul.f32 %v1406, %v1406
    %v1423 = vmul.f32 %v1407, %v1407
    %v1424 = vmul.f32 %v1408, %v1408
    %v1425 = vmul.f32 %v1409, %v1409
    %v1426 = vmul.f32 %v1410, %v1410
    %v1427 = vmul.f32 %v1411, %v1411
    %v1428 = vmul.f32 %v1412, %v1412
    %v1429 = vmul.f32 %v1413, %v1413
    %v1430 = vmul.f32 %v1414, %v1414
    %v1431 = vmul.f32 %v1415, %v1415
    %v1432 = vmul.f32 %v1416, %v1416
    %v1433 = vmul.f32 %v1417, %v1417
    %v1434 = vmul.f32 %v1418, %v1418
    %v1435 = vmul.f32 %v1419, %v1419
    %v1436 = vmul.f32 %v1420, %v1420
    %v1437 = vmul.f32 %v1421, %v1421
    %v1438 = vmul.f32 %v1422, %v1422
    %v1439 = vmul.f32 %v1423, %v1423
    %v1440 = vmul.f32 %v1424, %v1424
    %v1441 = vmul.f32 %v1425, %v1425
    %v1442 = vmul.f32 %v1426, %v1426
    %v1443 = vmul.f32 %v1427, %v1427
    %v1444 = vmul.f32 %v1428, %v1428
    %v1445 = vmul.f32 %v1429, %v1429
    %v1446 = vmul.f32 %v1430, %v1430
    %v1447 = vmul.f32 %v1431, %v1431
    %v1448 = vmul.f32 %v1400, %v1432
    %v1449 = vmul.f32 %v1401, %v1433
    %v1450 = vmul.f32 %v1402, %v1434
    %v1451 = vmul.f32 %v1403, %v1435
    %v1452 = vmul.f32 %v1404, %v1436
    %v1453 = vmul.f32 %v1405, %v1437
    %v1454 = vmul.f32 %v1406, %v1438
    %v1455 = vmul.f32 %v1407, %v1439
    %v1456 = vmul.f32 %v1408, %v1440
    %v1457 = vmul.f32 %v1409, %v1441
    %v1458 = vmul.f32 %v1410, %v1442
    %v1459 = vmul.f32 %v1411, %v1443
    %v1460 = vmul.f32 %v1412, %v1444
    %v1461 = vmul.f32 %v1413, %v1445
    %v1462 = vmul.f32 %v1414, %v1446
    %v1463 = vmul.f32 %v1415, %v1447
    %v1464 = vmul.f32 %v1432, %v1432
    %v1465 = vmul.f32 %v1433, %v1433
    %v1466 = vmul.f32 %v1434, %v1434
    %v1467 = vmul.f32 %v1435, %v1435
    %v1468 = vmul.f32 %v1436, %v1436
    %v1469 = vmul.f32 %v1437, %v1437
    %v1470 = vmul.f32 %v1438, %v1438
    %v1471 = vmul.f32 %v1439, %v1439
    %v1472 = vmul.f32 %v1440, %v1440
    %v1473 = vmul.f32 %v1441, %v1441
    %v1474 = vmul.f32 %v1442, %v1442
    %v1475 = vmul.f32 %v1443, %v1443
    %v1476 = vmul.f32 %v1444, %v1444
    %v1477 = vmul.f32 %v1445, %v1445
    %v1478 = vmul.f32 %v1446, %v1446
    %v1479 = vmul.f32 %v1447, %v1447
    %v1480 = vmul.f32 %v1464, %v1464
    %v1481 = vmul.f32 %v1465, %v1465
    %v1482 = vmul.f32 %v1466, %v1466
    %v1483 = vmul.f32 %v1467, %v1467
    %v1484 = vmul.f32 %v1468, %v1468
    %v1485 = vmul.f32 %v1469, %v1469
    %v1486 = vmul.f32 %v1470, %v1470
    %v1487 = vmul.f32 %v1471, %v1471
    %v1488 = vmul.f32 %v1472, %v1472
    %v1489 = vmul.f32 %v1473, %v1473
    %v1490 = vmul.f32 %v1474, %v1474
    %v1491 = vmul.f32 %v1475, %v1475
    %v1492 = vmul.f32 %v1476, %v1476
    %v1493 = vmul.f32 %v1477, %v1477
    %v1494 = vmul.f32 %v1478, %v1478
    %v1495 = vmul.f32 %v1479, %v1479
    %v1496 = vmul.f32 %v1480, %v1480
    %v1497 = vmul.f32 %v1481, %v1481
    %v1498 = vmul.f32 %v1482, %v1482
    %v1499 = vmul.f32 %v1483, %v1483
    %v1500 = vmul.f32 %v1484, %v1484
    %v1501 = vmul.f32 %v1485, %v1485
    %v1502 = vmul.f32 %v1486, %v1486
    %v1503 = vmul.f32 %v1487, %v1487
    %v1504 = vmul.f32 %v1488, %v1488
    %v1505 = vmul.f32 %v1489, %v1489
    %v1506 = vmul.f32 %v1490, %v1490
    %v1507 = vmul.f32 %v1491, %v1491
    %v1508 = vmul.f32 %v1492, %v1492
    %v1509 = vmul.f32 %v1493, %v1493
    %v1510 = vmul.f32 %v1494, %v1494
    %v1511 = vmul.f32 %v1495, %v1495
    %v1512 = vmul.f32 %v1448, %v1496
    %v1513 = vmul.f32 %v1449, %v1497
    %v1514 = vmul.f32 %v1450, %v1498
    %v1515 = vmul.f32 %v1451, %v1499
    %v1516 = vmul.f32 %v1452, %v1500
    %v1517 = vmul.f32 %v1453, %v1501
    %v1518 = vmul.f32 %v1454, %v1502
    %v1519 = vmul.f32 %v1455, %v1503
    %v1520 = vmul.f32 %v1456, %v1504
    %v1521 = vmul.f32 %v1457, %v1505
    %v1522 = vmul.f32 %v1458, %v1506
    %v1523 = vmul.f32 %v1459, %v1507
    %v1524 = vmul.f32 %v1460, %v1508
    %v1525 = vmul.f32 %v1461, %v1509
    %v1526 = vmul.f32 %v1462, %v1510
    %v1527 = vmul.f32 %v1463, %v1511
    %v1528 = vmul.f32 %v1496, %v1496
    %v1529 = vmul.f32 %v1497, %v1497
    %v1530 = vmul.f32 %v1498, %v1498
    %v1531 = vmul.f32 %v1499, %v1499
    %v1532 = vmul.f32 %v1500, %v1500
    %v1533 = vmul.f32 %v1501, %v1501
    %v1534 = vmul.f32 %v1502, %v1502
    %v1535 = vmul.f32 %v1503, %v1503
    %v1536 = vmul.f32 %v1504, %v1504
    %v1537 = vmul.f32 %v1505, %v1505
    %v1538 = vmul.f32 %v1506, %v1506
    %v1539 = vmul.f32 %v1507, %v1507
    %v1540 = vmul.f32 %v1508, %v1508
    %v1541 = vmul.f32 %v1509, %v1509
    %v1542 = vmul.f32 %v1510, %v1510
    %v1543 = vmul.f32 %v1511, %v1511
    %v1544 = vmul.f32 %v1512, %v1528
    %v1545 = vmul.f32 %v1513, %v1529
    %v1546 = vmul.f32 %v1514, %v1530
    %v1547 = vmul.f32 %v1515, %v1531
    %v1548 = vmul.f32 %v1516, %v1532
    %v1549 = vmul.f32 %v1517, %v1533
    %v1550 = vmul.f32 %v1518, %v1534
    %v1551 = vmul.f32 %v1519, %v1535
    %v1552 = vmul.f32 %v1520, %v1536
    %v1553 = vmul.f32 %v1521, %v1537
    %v1554 = vmul.f32 %v1522, %v1538
    %v1555 = vmul.f32 %v1523, %v1539
    %v1556 = vmul.f32 %v1524, %v1540
    %v1557 = vmul.f32 %v1525, %v1541
    %v1558 = vmul.f32 %v1526, %v1542
    %v1559 = vmul.f32 %v1527, %v1543
    %v1560 = vmin.f32 %v1544, 3e+38
    %v1561 = vmin.f32 %v1545, 3e+38
    %v1562 = vmin.f32 %v1546, 3e+38
    %v1563 = vmin.f32 %v1547, 3e+38
    %v1564 = vmin.f32 %v1548, 3e+38
    %v1565 = vmin.f32 %v1549, 3e+38
    %v1566 = vmin.f32 %v1550, 3e+38
    %v1567 = vmin.f32 %v1551, 3e+38
    %v1568 = vmin.f32 %v1552, 3e+38
    %v1569 = vmin.f32 %v1553, 3e+38
    %v1570 = vmin.f32 %v1554, 3e+38
    %v1571 = vmin.f32 %v1555, 3e+38
    %v1572 = vmin.f32 %v1556, 3e+38
    %v1573 = vmin.f32 %v1557, 3e+38
    %v1574 = vmin.f32 %v1558, 3e+38
    %v1575 = vmin.f32 %v1559, 3e+38
    %v1576 = vrcp.pop %v1560
    %v1577 = vrcp.pop %v1561
    %v1578 = vrcp.pop %v1562
    %v1579 = vrcp.pop %v1563
    %v1580 = vrcp.pop %v1564
    %v1581 = vrcp.pop %v1565
    %v1582 = vrcp.pop %v1566
    %v1583 = vrcp.pop %v1567
    %v1584 = vrcp.pop %v1568
    %v1585 = vrcp.pop %v1569
    %v1586 = vrcp.pop %v1570
    %v1587 = vrcp.pop %v1571
    %v1588 = vrcp.pop %v1572
    %v1589 = vrcp.pop %v1573
    %v1590 = vrcp.pop %v1574
    %v1591 = vrcp.pop %v1575
    %v1592 = vmul.f32 %v1560, %v1576
    %v1593 = vmul.f32 %v1561, %v1577
    %v1594 = vmul.f32 %v1562, %v1578
    %v1595 = vmul.f32 %v1563, %v1579
    %v1596 = vmul.f32 %v1564, %v1580
    %v1597 = vmul.f32 %v1565, %v1581
    %v1598 = vmul.f32 %v1566, %v1582
    %v1599 = vmul.f32 %v1567, %v1583
    %v1600 = vmul.f32 %v1568, %v1584
    %v1601 = vmul.f32 %v1569, %v1585
    %v1602 = vmul.f32 %v1570, %v1586
    %v1603 = vmul.f32 %v1571, %v1587
    %v1604 = vmul.f32 %v1572, %v1588
    %v1605 = vmul.f32 %v1573, %v1589
    %v1606 = vmul.f32 %v1574, %v1590
    %v1607 = vmul.f32 %v1575, %v1591
    %v1608 = vsub.f32 2.0, %v1592
    %v1609 = vsub.f32 2.0, %v1593
    %v1610 = vsub.f32 2.0, %v1594
    %v1611 = vsub.f32 2.0, %v1595
    %v1612 = vsub.f32 2.0, %v1596
    %v1613 = vsub.f32 2.0, %v1597
    %v1614 = vsub.f32 2.0, %v1598
    %v1615 = vsub.f32 2.0, %v1599
    %v1616 = vsub.f32 2.0, %v1600
    %v1617 = vsub.f32 2.0, %v1601
    %v1618 = vsub.f32 2.0, %v1602
    %v1619 = vsub.f32 2.0, %v1603
    %v1620 = vsub.f32 2.0, %v1604
    %v1621 = vsub.f32 2.0, %v1605
    %v1622 = vsub.f32 2.0, %v1606
    %v1623 = vsub.f32 2.0, %v1607
    %v1624 = vmul.f32 %v1576, %v1608
    %v1625 = vmul.f32 %v1577, %v1609
    %v1626 = vmul.f32 %v1578, %v1610
    %v1627 = vmul.f32 %v1579, %v1611
    %v1628 = vmul.f32 %v1580, %v1612
    %v1629 = vmul.f32 %v1581, %v1613
    %v1630 = vmul.f32 %v1582, %v1614
    %v1631 = vmul.f32 %v1583, %v1615
    %v1632 = vmul.f32 %v1584, %v1616
    %v1633 = vmul.f32 %v1585, %v1617
    %v1634 = vmul.f32 %v1586, %v1618
    %v1635 = vmul.f32 %v1587, %v1619
    %v1636 = vmul.f32 %v1588, %v1620
    %v1637 = vmul.f32 %v1589, %v1621
    %v1638 = vmul.f32 %v1590, %v1622
    %v1639 = vmul.f32 %v1591, %v1623
    %v1640 = vmul.f32 %v1624, 0.99450815
    %v1641 = vmul.f32 %v1625, 0.99450815
    %v1642 = vmul.f32 %v1626, 0.99450815
    %v1643 = vmul.f32 %v1627, 0.99450815
    %v1644 = vmul.f32 %v1628, 0.99450815
    %v1645 = vmul.f32 %v1629, 0.99450815
    %v1646 = vmul.f32 %v1630, 0.99450815
    %v1647 = vmul.f32 %v1631, 0.99450815
    %v1648 = vmul.f32 %v1632, 0.99450815
    %v1649 = vmul.f32 %v1633, 0.99450815
    %v1650 = vmul.f32 %v1634, 0.99450815
    %v1651 = vmul.f32 %v1635, 0.99450815
    %v1652 = vmul.f32 %v1636, 0.99450815
    %v1653 = vmul.f32 %v1637, 0.99450815
    %v1654 = vmul.f32 %v1638, 0.99450815
    %v1655 = vmul.f32 %v1639, 0.99450815
    %v1656 = vadd.f32 %v1368, %v1640
    %v1657 = vadd.f32 %v1369, %v1641
    %v1658 = vadd.f32 %v1370, %v1642
    %v1659 = vadd.f32 %v1371, %v1643
    %v1660 = vadd.f32 %v1372, %v1644
    %v1661 = vadd.f32 %v1373, %v1645
    %v1662 = vadd.f32 %v1374, %v1646
    %v1663 = vadd.f32 %v1375, %v1647
    %v1664 = vadd.f32 %v1376, %v1648
    %v1665 = vadd.f32 %v1377, %v1649
    %v1666 = vadd.f32 %v1378, %v1650
    %v1667 = vadd.f32 %v1379, %v1651
    %v1668 = vadd.f32 %v1380, %v1652
    %v1669 = vadd.f32 %v1381, %v1653
    %v1670 = vadd.f32 %v1382, %v1654
    %v1671 = vadd.f32 %v1383, %v1655
    %v1672 = vmul.f32 %v1368, %v1640
    %v1673 = vmul.f32 %v1369, %v1641
    %v1674 = vmul.f32 %v1370, %v1642
    %v1675 = vmul.f32 %v1371, %v1643
    %v1676 = vmul.f32 %v1372, %v1644
    %v1677 = vmul.f32 %v1373, %v1645
    %v1678 = vmul.f32 %v1374, %v1646
    %v1679 = vmul.f32 %v1375, %v1647
    %v1680 = vmul.f32 %v1376, %v1648
    %v1681 = vmul.f32 %v1377, %v1649
    %v1682 = vmul.f32 %v1378, %v1650
    %v1683 = vmul.f32 %v1379, %v1651
    %v1684 = vmul.f32 %v1380, %v1652
    %v1685 = vmul.f32 %v1381, %v1653
    %v1686 = vmul.f32 %v1382, %v1654
    %v1687 = vmul.f32 %v1383, %v1655
    %v1688 = vsub.f32 %v1656, %v1672
    %v1689 = vsub.f32 %v1657, %v1673
    %v1690 = vsub.f32 %v1658, %v1674
    %v1691 = vsub.f32 %v1659, %v1675
    %v1692 = vsub.f32 %v1660, %v1676
    %v1693 = vsub.f32 %v1661, %v1677
    %v1694 = vsub.f32 %v1662, %v1678
    %v1695 = vsub.f32 %v1663, %v1679
    %v1696 = vsub.f32 %v1664, %v1680
    %v1697 = vsub.f32 %v1665, %v1681
    %v1698 = vsub.f32 %v1666, %v1682
    %v1699 = vsub.f32 %v1667, %v1683
    %v1700 = vsub.f32 %v1668, %v1684
    %v1701 = vsub.f32 %v1669, %v1685
    %v1702 = vsub.f32 %v1670, %v1686
    %v1703 = vsub.f32 %v1671, %v1687
    %v1704 = vmul.f32 %v794, 0.01
    %v1705 = vmul.f32 %v795, 0.01
    %v1706 = vmul.f32 %v796, 0.01
    %v1707 = vmul.f32 %v797, 0.01
    %v1708 = vmul.f32 %v798, 0.01
    %v1709 = vmul.f32 %v799, 0.01
    %v1710 = vmul.f32 %v800, 0.01
    %v1711 = vmul.f32 %v801, 0.01
    %v1712 = vmul.f32 %v802, 0.01
    %v1713 = vmul.f32 %v803, 0.01
    %v1714 = vmul.f32 %v804, 0.01
    %v1715 = vmul.f32 %v805, 0.01
    %v1716 = vmul.f32 %v806, 0.01
    %v1717 = vmul.f32 %v807, 0.01
    %v1718 = vmul.f32 %v808, 0.01
    %v1719 = vmul.f32 %v809, 0.01
    %v1720 = vadd.f32 %v1704, 1.0
    %v1721 = vadd.f32 %v1705, 1.0
    %v1722 = vadd.f32 %v1706, 1.0
    %v1723 = vadd.f32 %v1707, 1.0
    %v1724 = vadd.f32 %v1708, 1.0
    %v1725 = vadd.f32 %v1709, 1.0
    %v1726 = vadd.f32 %v1710, 1.0
    %v1727 = vadd.f32 %v1711, 1.0
    %v1728 = vadd.f32 %v1712, 1.0
    %v1729 = vadd.f32 %v1713, 1.0
    %v1730 = vadd.f32 %v1714, 1.0
    %v1731 = vadd.f32 %v1715, 1.0
    %v1732 = vadd.f32 %v1716, 1.0
    %v1733 = vadd.f32 %v1717, 1.0
    %v1734 = vadd.f32 %v1718, 1.0
    %v1735 = vadd.f32 %v1719, 1.0
    %v1736 = vmul.f32 %v1720, %v1720
    %v1737 = vmul.f32 %v1721, %v1721
    %v1738 = vmul.f32 %v1722, %v1722
    %v1739 = vmul.f32 %v1723, %v1723
    %v1740 = vmul.f32 %v1724, %v1724
    %v1741 = vmul.f32 %v1725, %v1725
    %v1742 = vmul.f32 %v1726, %v1726
    %v1743 = vmul.f32 %v1727, %v1727
    %v1744 = vmul.f32 %v1728, %v1728
    %v1745 = vmul.f32 %v1729, %v1729
    %v1746 = vmul.f32 %v1730, %v1730
    %v1747 = vmul.f32 %v1731, %v1731
    %v1748 = vmul.f32 %v1732, %v1732
    %v1749 = vmul.f32 %v1733, %v1733
    %v1750 = vmul.f32 %v1734, %v1734
    %v1751 = vmul.f32 %v1735, %v1735
    %v1752 = vmul.f32 %v1736, %v1736
    %v1753 = vmul.f32 %v1737, %v1737
    %v1754 = vmul.f32 %v1738, %v1738
    %v1755 = vmul.f32 %v1739, %v1739
    %v1756 = vmul.f32 %v1740, %v1740
    %v1757 = vmul.f32 %v1741, %v1741
    %v1758 = vmul.f32 %v1742, %v1742
    %v1759 = vmul.f32 %v1743, %v1743
    %v1760 = vmul.f32 %v1744, %v1744
    %v1761 = vmul.f32 %v1745, %v1745
    %v1762 = vmul.f32 %v1746, %v1746
    %v1763 = vmul.f32 %v1747, %v1747
    %v1764 = vmul.f32 %v1748, %v1748
    %v1765 = vmul.f32 %v1749, %v1749
    %v1766 = vmul.f32 %v1750, %v1750
    %v1767 = vmul.f32 %v1751, %v1751
    %v1768 = vmul.f32 %v1720, %v1752
    %v1769 = vmul.f32 %v1721, %v1753
    %v1770 = vmul.f32 %v1722, %v1754
    %v1771 = vmul.f32 %v1723, %v1755
    %v1772 = vmul.f32 %v1724, %v1756
    %v1773 = vmul.f32 %v1725, %v1757
    %v1774 = vmul.f32 %v1726, %v1758
    %v1775 = vmul.f32 %v1727, %v1759
    %v1776 = vmul.f32 %v1728, %v1760
    %v1777 = vmul.f32 %v1729, %v1761
    %v1778 = vmul.f32 %v1730, %v1762
    %v1779 = vmul.f32 %v1731, %v1763
    %v1780 = vmul.f32 %v1732, %v1764
    %v1781 = vmul.f32 %v1733, %v1765
    %v1782 = vmul.f32 %v1734, %v1766
    %v1783 = vmul.f32 %v1735, %v1767
    %v1784 = vmul.f32 %v1752, %v1752
    %v1785 = vmul.f32 %v1753, %v1753
    %v1786 = vmul.f32 %v1754, %v1754
    %v1787 = vmul.f32 %v1755, %v1755
    %v1788 = vmul.f32 %v1756, %v1756
    %v1789 = vmul.f32 %v1757, %v1757
    %v1790 = vmul.f32 %v1758, %v1758
    %v1791 = vmul.f32 %v1759, %v1759
    %v1792 = vmul.f32 %v1760, %v1760
    %v1793 = vmul.f32 %v1761, %v1761
    %v1794 = vmul.f32 %v1762, %v1762
    %v1795 = vmul.f32 %v1763, %v1763
    %v1796 = vmul.f32 %v1764, %v1764
    %v1797 = vmul.f32 %v1765, %v1765
    %v1798 = vmul.f32 %v1766, %v1766
    %v1799 = vmul.f32 %v1767, %v1767
    %v1800 = vmul.f32 %v1784, %v1784
    %v1801 = vmul.f32 %v1785, %v1785
    %v1802 = vmul.f32 %v1786, %v1786
    %v1803 = vmul.f32 %v1787, %v1787
    %v1804 = vmul.f32 %v1788, %v1788
    %v1805 = vmul.f32 %v1789, %v1789
    %v1806 = vmul.f32 %v1790, %v1790
    %v1807 = vmul.f32 %v1791, %v1791
    %v1808 = vmul.f32 %v1792, %v1792
    %v1809 = vmul.f32 %v1793, %v1793
    %v1810 = vmul.f32 %v1794, %v1794
    %v1811 = vmul.f32 %v1795, %v1795
    %v1812 = vmul.f32 %v1796, %v1796
    %v1813 = vmul.f32 %v1797, %v1797
    %v1814 = vmul.f32 %v1798, %v1798
    %v1815 = vmul.f32 %v1799, %v1799
    %v1816 = vmul.f32 %v1800, %v1800
    %v1817 = vmul.f32 %v1801, %v1801
    %v1818 = vmul.f32 %v1802, %v1802
    %v1819 = vmul.f32 %v1803, %v1803
    %v1820 = vmul.f32 %v1804, %v1804
    %v1821 = vmul.f32 %v1805, %v1805
    %v1822 = vmul.f32 %v1806, %v1806
    %v1823 = vmul.f32 %v1807, %v1807
    %v1824 = vmul.f32 %v1808, %v1808
    %v1825 = vmul.f32 %v1809, %v1809
    %v1826 = vmul.f32 %v1810, %v1810
    %v1827 = vmul.f32 %v1811, %v1811
    %v1828 = vmul.f32 %v1812, %v1812
    %v1829 = vmul.f32 %v1813, %v1813
    %v1830 = vmul.f32 %v1814, %v1814
    %v1831 = vmul.f32 %v1815, %v1815
    %v1832 = vmul.f32 %v1768, %v1816
    %v1833 = vmul.f32 %v1769, %v1817
    %v1834 = vmul.f32 %v1770, %v1818
    %v1835 = vmul.f32 %v1771, %v1819
    %v1836 = vmul.f32 %v1772, %v1820
    %v1837 = vmul.f32 %v1773, %v1821
    %v1838 = vmul.f32 %v1774, %v1822
    %v1839 = vmul.f32 %v1775, %v1823
    %v1840 = vmul.f32 %v1776, %v1824
    %v1841 = vmul.f32 %v1777, %v1825
    %v1842 = vmul.f32 %v1778, %v1826
    %v1843 = vmul.f32 %v1779, %v1827
    %v1844 = vmul.f32 %v1780, %v1828
    %v1845 = vmul.f32 %v1781, %v1829
    %v1846 = vmul.f32 %v1782, %v1830
    %v1847 = vmul.f32 %v1783, %v1831
    %v1848 = vmul.f32 %v1816, %v1816
    %v1849 = vmul.f32 %v1817, %v1817
    %v1850 = vmul.f32 %v1818, %v1818
    %v1851 = vmul.f32 %v1819, %v1819
    %v1852 = vmul.f32 %v1820, %v1820
    %v1853 = vmul.f32 %v1821, %v1821
    %v1854 = vmul.f32 %v1822, %v1822
    %v1855 = vmul.f32 %v1823, %v1823
    %v1856 = vmul.f32 %v1824, %v1824
    %v1857 = vmul.f32 %v1825, %v1825
    %v1858 = vmul.f32 %v1826, %v1826
    %v1859 = vmul.f32 %v1827, %v1827
    %v1860 = vmul.f32 %v1828, %v1828
    %v1861 = vmul.f32 %v1829, %v1829
    %v1862 = vmul.f32 %v1830, %v1830
    %v1863 = vmul.f32 %v1831, %v1831
    %v1864 = vmul.f32 %v1832, %v1848
    %v1865 = vmul.f32 %v1833, %v1849
    %v1866 = vmul.f32 %v1834, %v1850
    %v1867 = vmul.f32 %v1835, %v1851
    %v1868 = vmul.f32 %v1836, %v1852
    %v1869 = vmul.f32 %v1837, %v1853
    %v1870 = vmul.f32 %v1838, %v1854
    %v1871 = vmul.f32 %v1839, %v1855
    %v1872 = vmul.f32 %v1840, %v1856
    %v1873 = vmul.f32 %v1841, %v1857
    %v1874 = vmul.f32 %v1842, %v1858
    %v1875 = vmul.f32 %v1843, %v1859
    %v1876 = vmul.f32 %v1844, %v1860
    %v1877 = vmul.f32 %v1845, %v1861
    %v1878 = vmul.f32 %v1846, %v1862
    %v1879 = vmul.f32 %v1847, %v1863
    %v1880 = vmin.f32 %v1864, 3e+38
    %v1881 = vmin.f32 %v1865, 3e+38
    %v1882 = vmin.f32 %v1866, 3e+38
    %v1883 = vmin.f32 %v1867, 3e+38
    %v1884 = vmin.f32 %v1868, 3e+38
    %v1885 = vmin.f32 %v1869, 3e+38
    %v1886 = vmin.f32 %v1870, 3e+38
    %v1887 = vmin.f32 %v1871, 3e+38
    %v1888 = vmin.f32 %v1872, 3e+38
    %v1889 = vmin.f32 %v1873, 3e+38
    %v1890 = vmin.f32 %v1874, 3e+38
    %v1891 = vmin.f32 %v1875, 3e+38
    %v1892 = vmin.f32 %v1876, 3e+38
    %v1893 = vmin.f32 %v1877, 3e+38
    %v1894 = vmin.f32 %v1878, 3e+38
    %v1895 = vmin.f32 %v1879, 3e+38
    %v1896 = vrcp.pop %v1880
    %v1897 = vrcp.pop %v1881
    %v1898 = vrcp.pop %v1882
    %v1899 = vrcp.pop %v1883
    %v1900 = vrcp.pop %v1884
    %v1901 = vrcp.pop %v1885
    %v1902 = vrcp.pop %v1886
    %v1903 = vrcp.pop %v1887
    %v1904 = vrcp.pop %v1888
    %v1905 = vrcp.pop %v1889
    %v1906 = vrcp.pop %v1890
    %v1907 = vrcp.pop %v1891
    %v1908 = vrcp.pop %v1892
    %v1909 = vrcp.pop %v1893
    %v1910 = vrcp.pop %v1894
    %v1911 = vrcp.pop %v1895
    %v1912 = vmul.f32 %v1880, %v1896
    %v1913 = vmul.f32 %v1881, %v1897
    %v1914 = vmul.f32 %v1882, %v1898
    %v1915 = vmul.f32 %v1883, %v1899
    %v1916 = vmul.f32 %v1884, %v1900
    %v1917 = vmul.f32 %v1885, %v1901
    %v1918 = vmul.f32 %v1886, %v1902
    %v1919 = vmul.f32 %v1887, %v1903
    %v1920 = vmul.f32 %v1888, %v1904
    %v1921 = vmul.f32 %v1889, %v1905
    %v1922 = vmul.f32 %v1890, %v1906
    %v1923 = vmul.f32 %v1891, %v1907
    %v1924 = vmul.f32 %v1892, %v1908
    %v1925 = vmul.f32 %v1893, %v1909
    %v1926 = vmul.f32 %v1894, %v1910
    %v1927 = vmul.f32 %v1895, %v1911
    %v1928 = vsub.f32 2.0, %v1912
    %v1929 = vsub.f32 2.0, %v1913
    %v1930 = vsub.f32 2.0, %v1914
    %v1931 = vsub.f32 2.0, %v1915
    %v1932 = vsub.f32 2.0, %v1916
    %v1933 = vsub.f32 2.0, %v1917
    %v1934 = vsub.f32 2.0, %v1918
    %v1935 = vsub.f32 2.0, %v1919
    %v1936 = vsub.f32 2.0, %v1920
    %v1937 = vsub.f32 2.0, %v1921
    %v1938 = vsub.f32 2.0, %v1922
    %v1939 = vsub.f32 2.0, %v1923
    %v1940 = vsub.f32 2.0, %v1924
    %v1941 = vsub.f32 2.0, %v1925
    %v1942 = vsub.f32 2.0, %v1926
    %v1943 = vsub.f32 2.0, %v1927
    %v1944 = vmul.f32 %v1896, %v1928
    %v1945 = vmul.f32 %v1897, %v1929
    %v1946 = vmul.f32 %v1898, %v1930
    %v1947 = vmul.f32 %v1899, %v1931
    %v1948 = vmul.f32 %v1900, %v1932
    %v1949 = vmul.f32 %v1901, %v1933
    %v1950 = vmul.f32 %v1902, %v1934
    %v1951 = vmul.f32 %v1903, %v1935
    %v1952 = vmul.f32 %v1904, %v1936
    %v1953 = vmul.f32 %v1905, %v1937
    %v1954 = vmul.f32 %v1906, %v1938
    %v1955 = vmul.f32 %v1907, %v1939
    %v1956 = vmul.f32 %v1908, %v1940
    %v1957 = vmul.f32 %v1909, %v1941
    %v1958 = vmul.f32 %v1910, %v1942
    %v1959 = vmul.f32 %v1911, %v1943
    %v1960 = vmul.f32 %v1944, 0.99450815
    %v1961 = vmul.f32 %v1945, 0.99450815
    %v1962 = vmul.f32 %v1946, 0.99450815
    %v1963 = vmul.f32 %v1947, 0.99450815
    %v1964 = vmul.f32 %v1948, 0.99450815
    %v1965 = vmul.f32 %v1949, 0.99450815
    %v1966 = vmul.f32 %v1950, 0.99450815
    %v1967 = vmul.f32 %v1951, 0.99450815
    %v1968 = vmul.f32 %v1952, 0.99450815
    %v1969 = vmul.f32 %v1953, 0.99450815
    %v1970 = vmul.f32 %v1954, 0.99450815
    %v1971 = vmul.f32 %v1955, 0.99450815
    %v1972 = vmul.f32 %v1956, 0.99450815
    %v1973 = vmul.f32 %v1957, 0.99450815
    %v1974 = vmul.f32 %v1958, 0.99450815
    %v1975 = vmul.f32 %v1959, 0.99450815
    %v1976 = vadd.f32 %v1960, %v1960
    %v1977 = vadd.f32 %v1961, %v1961
    %v1978 = vadd.f32 %v1962, %v1962
    %v1979 = vadd.f32 %v1963, %v1963
    %v1980 = vadd.f32 %v1964, %v1964
    %v1981 = vadd.f32 %v1965, %v1965
    %v1982 = vadd.f32 %v1966, %v1966
    %v1983 = vadd.f32 %v1967, %v1967
    %v1984 = vadd.f32 %v1968, %v1968
    %v1985 = vadd.f32 %v1969, %v1969
    %v1986 = vadd.f32 %v1970, %v1970
    %v1987 = vadd.f32 %v1971, %v1971
    %v1988 = vadd.f32 %v1972, %v1972
    %v1989 = vadd.f32 %v1973, %v1973
    %v1990 = vadd.f32 %v1974, %v1974
    %v1991 = vadd.f32 %v1975, %v1975
    %v1992 = vmul.f32 %v1960, %v1960
    %v1993 = vmul.f32 %v1961, %v1961
    %v1994 = vmul.f32 %v1962, %v1962
    %v1995 = vmul.f32 %v1963, %v1963
    %v1996 = vmul.f32 %v1964, %v1964
    %v1997 = vmul.f32 %v1965, %v1965
    %v1998 = vmul.f32 %v1966, %v1966
    %v1999 = vmul.f32 %v1967, %v1967
    %v2000 = vmul.f32 %v1968, %v1968
    %v2001 = vmul.f32 %v1969, %v1969
    %v2002 = vmul.f32 %v1970, %v1970
    %v2003 = vmul.f32 %v1971, %v1971
    %v2004 = vmul.f32 %v1972, %v1972
    %v2005 = vmul.f32 %v1973, %v1973
    %v2006 = vmul.f32 %v1974, %v1974
    %v2007 = vmul.f32 %v1975, %v1975
    %v2008 = vsub.f32 %v1976, %v1992
    %v2009 = vsub.f32 %v1977, %v1993
    %v2010 = vsub.f32 %v1978, %v1994
    %v2011 = vsub.f32 %v1979, %v1995
    %v2012 = vsub.f32 %v1980, %v1996
    %v2013 = vsub.f32 %v1981, %v1997
    %v2014 = vsub.f32 %v1982, %v1998
    %v2015 = vsub.f32 %v1983, %v1999
    %v2016 = vsub.f32 %v1984, %v2000
    %v2017 = vsub.f32 %v1985, %v2001
    %v2018 = vsub.f32 %v1986, %v2002
    %v2019 = vsub.f32 %v1987, %v2003
    %v2020 = vsub.f32 %v1988, %v2004
    %v2021 = vsub.f32 %v1989, %v2005
    %v2022 = vsub.f32 %v1990, %v2006
    %v2023 = vsub.f32 %v1991, %v2007
    %v2024 = vadd.f32 %v1688, 1e-12
    %v2025 = vadd.f32 %v1689, 1e-12
    %v2026 = vadd.f32 %v1690, 1e-12
    %v2027 = vadd.f32 %v1691, 1e-12
    %v2028 = vadd.f32 %v1692, 1e-12
    %v2029 = vadd.f32 %v1693, 1e-12
    %v2030 = vadd.f32 %v1694, 1e-12
    %v2031 = vadd.f32 %v1695, 1e-12
    %v2032 = vadd.f32 %v1696, 1e-12
    %v2033 = vadd.f32 %v1697, 1e-12
    %v2034 = vadd.f32 %v1698, 1e-12
    %v2035 = vadd.f32 %v1699, 1e-12
    %v2036 = vadd.f32 %v1700, 1e-12
    %v2037 = vadd.f32 %v1701, 1e-12
    %v2038 = vadd.f32 %v1702, 1e-12
    %v2039 = vadd.f32 %v1703, 1e-12
    %v2040 = vadd.f32 %v2008, 1e-12
    %v2041 = vadd.f32 %v2009, 1e-12
    %v2042 = vadd.f32 %v2010, 1e-12
    %v2043 = vadd.f32 %v2011, 1e-12
    %v2044 = vadd.f32 %v2012, 1e-12
    %v2045 = vadd.f32 %v2013, 1e-12
    %v2046 = vadd.f32 %v2014, 1e-12
    %v2047 = vadd.f32 %v2015, 1e-12
    %v2048 = vadd.f32 %v2016, 1e-12
    %v2049 = vadd.f32 %v2017, 1e-12
    %v2050 = vadd.f32 %v2018, 1e-12
    %v2051 = vadd.f32 %v2019, 1e-12
    %v2052 = vadd.f32 %v2020, 1e-12
    %v2053 = vadd.f32 %v2021, 1e-12
    %v2054 = vadd.f32 %v2022, 1e-12
    %v2055 = vadd.f32 %v2023, 1e-12
    %v2056 = vadd.f32 %v2040, 1e-12
    %v2057 = vadd.f32 %v2041, 1e-12
    %v2058 = vadd.f32 %v2042, 1e-12
    %v2059 = vadd.f32 %v2043, 1e-12
    %v2060 = vadd.f32 %v2044, 1e-12
    %v2061 = vadd.f32 %v2045, 1e-12
    %v2062 = vadd.f32 %v2046, 1e-12
    %v2063 = vadd.f32 %v2047, 1e-12
    %v2064 = vadd.f32 %v2048, 1e-12
    %v2065 = vadd.f32 %v2049, 1e-12
    %v2066 = vadd.f32 %v2050, 1e-12
    %v2067 = vadd.f32 %v2051, 1e-12
    %v2068 = vadd.f32 %v2052, 1e-12
    %v2069 = vadd.f32 %v2053, 1e-12
    %v2070 = vadd.f32 %v2054, 1e-12
    %v2071 = vadd.f32 %v2055, 1e-12
    %v2072 = vlog2.pop %v2056
    %v2073 = vmul.f32 %v2072, 0.6931472
    %v2074 = vlog2.pop %v2057
    %v2075 = vmul.f32 %v2074, 0.6931472
    %v2076 = vlog2.pop %v2058
    %v2077 = vmul.f32 %v2076, 0.6931472
    %v2078 = vlog2.pop %v2059
    %v2079 = vmul.f32 %v2078, 0.6931472
    %v2080 = vlog2.pop %v2060
    %v2081 = vmul.f32 %v2080, 0.6931472
    %v2082 = vlog2.pop %v2061
    %v2083 = vmul.f32 %v2082, 0.6931472
    %v2084 = vlog2.pop %v2062
    %v2085 = vmul.f32 %v2084, 0.6931472
    %v2086 = vlog2.pop %v2063
    %v2087 = vmul.f32 %v2086, 0.6931472
    %v2088 = vlog2.pop %v2064
    %v2089 = vmul.f32 %v2088, 0.6931472
    %v2090 = vlog2.pop %v2065
    %v2091 = vmul.f32 %v2090, 0.6931472
    %v2092 = vlog2.pop %v2066
    %v2093 = vmul.f32 %v2092, 0.6931472
    %v2094 = vlog2.pop %v2067
    %v2095 = vmul.f32 %v2094, 0.6931472
    %v2096 = vlog2.pop %v2068
    %v2097 = vmul.f32 %v2096, 0.6931472
    %v2098 = vlog2.pop %v2069
    %v2099 = vmul.f32 %v2098, 0.6931472
    %v2100 = vlog2.pop %v2070
    %v2101 = vmul.f32 %v2100, 0.6931472
    %v2102 = vlog2.pop %v2071
    %v2103 = vmul.f32 %v2102, 0.6931472
    %v2104 = vmul.f32 %v2024, %v2073
    %v2105 = vmul.f32 %v2025, %v2075
    %v2106 = vmul.f32 %v2026, %v2077
    %v2107 = vmul.f32 %v2027, %v2079
    %v2108 = vmul.f32 %v2028, %v2081
    %v2109 = vmul.f32 %v2029, %v2083
    %v2110 = vmul.f32 %v2030, %v2085
    %v2111 = vmul.f32 %v2031, %v2087
    %v2112 = vmul.f32 %v2032, %v2089
    %v2113 = vmul.f32 %v2033, %v2091
    %v2114 = vmul.f32 %v2034, %v2093
    %v2115 = vmul.f32 %v2035, %v2095
    %v2116 = vmul.f32 %v2036, %v2097
    %v2117 = vmul.f32 %v2037, %v2099
    %v2118 = vmul.f32 %v2038, %v2101
    %v2119 = vmul.f32 %v2039, %v2103
    %v2120 = vsub.f32 1.0, %v2024
    %v2121 = vsub.f32 1.0, %v2025
    %v2122 = vsub.f32 1.0, %v2026
    %v2123 = vsub.f32 1.0, %v2027
    %v2124 = vsub.f32 1.0, %v2028
    %v2125 = vsub.f32 1.0, %v2029
    %v2126 = vsub.f32 1.0, %v2030
    %v2127 = vsub.f32 1.0, %v2031
    %v2128 = vsub.f32 1.0, %v2032
    %v2129 = vsub.f32 1.0, %v2033
    %v2130 = vsub.f32 1.0, %v2034
    %v2131 = vsub.f32 1.0, %v2035
    %v2132 = vsub.f32 1.0, %v2036
    %v2133 = vsub.f32 1.0, %v2037
    %v2134 = vsub.f32 1.0, %v2038
    %v2135 = vsub.f32 1.0, %v2039
    %v2136 = vsub.f32 1.0, %v2040
    %v2137 = vsub.f32 1.0, %v2041
    %v2138 = vsub.f32 1.0, %v2042
    %v2139 = vsub.f32 1.0, %v2043
    %v2140 = vsub.f32 1.0, %v2044
    %v2141 = vsub.f32 1.0, %v2045
    %v2142 = vsub.f32 1.0, %v2046
    %v2143 = vsub.f32 1.0, %v2047
    %v2144 = vsub.f32 1.0, %v2048
    %v2145 = vsub.f32 1.0, %v2049
    %v2146 = vsub.f32 1.0, %v2050
    %v2147 = vsub.f32 1.0, %v2051
    %v2148 = vsub.f32 1.0, %v2052
    %v2149 = vsub.f32 1.0, %v2053
    %v2150 = vsub.f32 1.0, %v2054
    %v2151 = vsub.f32 1.0, %v2055
    %v2152 = vadd.f32 %v2136, 1e-12
    %v2153 = vadd.f32 %v2137, 1e-12
    %v2154 = vadd.f32 %v2138, 1e-12
    %v2155 = vadd.f32 %v2139, 1e-12
    %v2156 = vadd.f32 %v2140, 1e-12
    %v2157 = vadd.f32 %v2141, 1e-12
    %v2158 = vadd.f32 %v2142, 1e-12
    %v2159 = vadd.f32 %v2143, 1e-12
    %v2160 = vadd.f32 %v2144, 1e-12
    %v2161 = vadd.f32 %v2145, 1e-12
    %v2162 = vadd.f32 %v2146, 1e-12
    %v2163 = vadd.f32 %v2147, 1e-12
    %v2164 = vadd.f32 %v2148, 1e-12
    %v2165 = vadd.f32 %v2149, 1e-12
    %v2166 = vadd.f32 %v2150, 1e-12
    %v2167 = vadd.f32 %v2151, 1e-12
    %v2168 = vlog2.pop %v2152
    %v2169 = vmul.f32 %v2168, 0.6931472
    %v2170 = vlog2.pop %v2153
    %v2171 = vmul.f32 %v2170, 0.6931472
    %v2172 = vlog2.pop %v2154
    %v2173 = vmul.f32 %v2172, 0.6931472
    %v2174 = vlog2.pop %v2155
    %v2175 = vmul.f32 %v2174, 0.6931472
    %v2176 = vlog2.pop %v2156
    %v2177 = vmul.f32 %v2176, 0.6931472
    %v2178 = vlog2.pop %v2157
    %v2179 = vmul.f32 %v2178, 0.6931472
    %v2180 = vlog2.pop %v2158
    %v2181 = vmul.f32 %v2180, 0.6931472
    %v2182 = vlog2.pop %v2159
    %v2183 = vmul.f32 %v2182, 0.6931472
    %v2184 = vlog2.pop %v2160
    %v2185 = vmul.f32 %v2184, 0.6931472
    %v2186 = vlog2.pop %v2161
    %v2187 = vmul.f32 %v2186, 0.6931472
    %v2188 = vlog2.pop %v2162
    %v2189 = vmul.f32 %v2188, 0.6931472
    %v2190 = vlog2.pop %v2163
    %v2191 = vmul.f32 %v2190, 0.6931472
    %v2192 = vlog2.pop %v2164
    %v2193 = vmul.f32 %v2192, 0.6931472
    %v2194 = vlog2.pop %v2165
    %v2195 = vmul.f32 %v2194, 0.6931472
    %v2196 = vlog2.pop %v2166
    %v2197 = vmul.f32 %v2196, 0.6931472
    %v2198 = vlog2.pop %v2167
    %v2199 = vmul.f32 %v2198, 0.6931472
    %v2200 = vmul.f32 %v2120, %v2169
    %v2201 = vmul.f32 %v2121, %v2171
    %v2202 = vmul.f32 %v2122, %v2173
    %v2203 = vmul.f32 %v2123, %v2175
    %v2204 = vmul.f32 %v2124, %v2177
    %v2205 = vmul.f32 %v2125, %v2179
    %v2206 = vmul.f32 %v2126, %v2181
    %v2207 = vmul.f32 %v2127, %v2183
    %v2208 = vmul.f32 %v2128, %v2185
    %v2209 = vmul.f32 %v2129, %v2187
    %v2210 = vmul.f32 %v2130, %v2189
    %v2211 = vmul.f32 %v2131, %v2191
    %v2212 = vmul.f32 %v2132, %v2193
    %v2213 = vmul.f32 %v2133, %v2195
    %v2214 = vmul.f32 %v2134, %v2197
    %v2215 = vmul.f32 %v2135, %v2199
    %v2216 = vadd.f32 %v2104, %v2200
    %v2217 = vadd.f32 %v2105, %v2201
    %v2218 = vadd.f32 %v2106, %v2202
    %v2219 = vadd.f32 %v2107, %v2203
    %v2220 = vadd.f32 %v2108, %v2204
    %v2221 = vadd.f32 %v2109, %v2205
    %v2222 = vadd.f32 %v2110, %v2206
    %v2223 = vadd.f32 %v2111, %v2207
    %v2224 = vadd.f32 %v2112, %v2208
    %v2225 = vadd.f32 %v2113, %v2209
    %v2226 = vadd.f32 %v2114, %v2210
    %v2227 = vadd.f32 %v2115, %v2211
    %v2228 = vadd.f32 %v2116, %v2212
    %v2229 = vadd.f32 %v2117, %v2213
    %v2230 = vadd.f32 %v2118, %v2214
    %v2231 = vadd.f32 %v2119, %v2215
    %s2232 = smul.u32 0, 128
    %s2233 = smul.u32 0, 128
    %s2234 = sadd.s32 %s2233, 128
    %p2235 = scmp.lt.s32.totalorder %s2232, %s2234
    %s2236 = sadd.s32 %s2232, 128
    %p2237 = scmp.lt.s32.totalorder %s2233, %s2236
    %p2238 = pnand %p2235, %p2237
    %p2239 = pneg %p2238
    %p2240 = scmp.gt.s32.totalorder %s2236, 32
    %p2241 = por %p2239, %p2240
    %p2242 = scmp.gt.s32.totalorder %s2234, 32
    %p2243 = por %p2241, %p2242
    // Predicated region
    $region54: #{tpu_custom_call.1} parent=1 // pred_check
      %p2244 = pneg %p2243
    $region55: #{tpu_custom_call.1} parent=1 // pred_check_branch
      %2246 = sbr.rel (%p2244) target = $region57
    $region56: #{tpu_custom_call.1} parent=1 // pred_region
      %v2247 = vlaneseq
      %v2248 = vshrl.u32 %v2247, 7
      %v2249 = vadd.s32 %v2248, 8
      %v2250 = vadd.s32 %v2248, 16
      %v2251 = vadd.s32 %v2248, 24
      %v2252 = vadd.s32 %v2248, 32
      %v2253 = vadd.s32 %v2248, 40
      %v2254 = vadd.s32 %v2248, 48
      %v2255 = vadd.s32 %v2248, 56
      %v2256 = vadd.s32 %v2248, 64
      %v2257 = vadd.s32 %v2248, 72
      %v2258 = vadd.s32 %v2248, 80
      %v2259 = vadd.s32 %v2248, 88
      %v2260 = vadd.s32 %v2248, 96
      %v2261 = vadd.s32 %v2248, 104
      %v2262 = vadd.s32 %v2248, 112
      %v2263 = vadd.s32 %v2248, 120
      %v2264 = vstv %s2232
      %v2265 = vadd.s32 %v2264, %v2248
      %v2266 = vadd.s32 %v2264, %v2249
      %v2267 = vadd.s32 %v2264, %v2250
      %v2268 = vadd.s32 %v2264, %v2251
      %v2269 = vadd.s32 %v2264, %v2252
      %v2270 = vadd.s32 %v2264, %v2253
      %v2271 = vadd.s32 %v2264, %v2254
      %v2272 = vadd.s32 %v2264, %v2255
      %v2273 = vadd.s32 %v2264, %v2256
      %v2274 = vadd.s32 %v2264, %v2257
      %v2275 = vadd.s32 %v2264, %v2258
      %v2276 = vadd.s32 %v2264, %v2259
      %v2277 = vadd.s32 %v2264, %v2260
      %v2278 = vadd.s32 %v2264, %v2261
      %v2279 = vadd.s32 %v2264, %v2262
      %v2280 = vadd.s32 %v2264, %v2263
      %v2281 = vlaneseq
      %v2282 = vand.u32 %v2281, 127
      %v2283 = vstv %s2233
      %v2284 = vadd.s32 %v2283, %v2282
      %vm2285 = vcmp.ne.s32.totalorder %v2265, %v2284
      %vm2286 = vcmp.ne.s32.totalorder %v2266, %v2284
      %vm2287 = vcmp.ne.s32.totalorder %v2267, %v2284
      %vm2288 = vcmp.ne.s32.totalorder %v2268, %v2284
      %vm2289 = vcmp.ne.s32.totalorder %v2269, %v2284
      %vm2290 = vcmp.ne.s32.totalorder %v2270, %v2284
      %vm2291 = vcmp.ne.s32.totalorder %v2271, %v2284
      %vm2292 = vcmp.ne.s32.totalorder %v2272, %v2284
      %vm2293 = vcmp.ne.s32.totalorder %v2273, %v2284
      %vm2294 = vcmp.ne.s32.totalorder %v2274, %v2284
      %vm2295 = vcmp.ne.s32.totalorder %v2275, %v2284
      %vm2296 = vcmp.ne.s32.totalorder %v2276, %v2284
      %vm2297 = vcmp.ne.s32.totalorder %v2277, %v2284
      %vm2298 = vcmp.ne.s32.totalorder %v2278, %v2284
      %vm2299 = vcmp.ne.s32.totalorder %v2279, %v2284
      %vm2300 = vcmp.ne.s32.totalorder %v2280, %v2284
      %vm2301 = vcmp.lt.s32.totalorder %v2265, 32
      %vm2302 = vcmp.lt.s32.totalorder %v2266, 32
      %vm2303 = vcmp.lt.s32.totalorder %v2267, 32
      %vm2304 = vcmp.lt.s32.totalorder %v2268, 32
      %vm2305 = vcmp.lt.s32.totalorder %v2269, 32
      %vm2306 = vcmp.lt.s32.totalorder %v2270, 32
      %vm2307 = vcmp.lt.s32.totalorder %v2271, 32
      %vm2308 = vcmp.lt.s32.totalorder %v2272, 32
      %vm2309 = vcmp.lt.s32.totalorder %v2273, 32
      %vm2310 = vcmp.lt.s32.totalorder %v2274, 32
      %vm2311 = vcmp.lt.s32.totalorder %v2275, 32
      %vm2312 = vcmp.lt.s32.totalorder %v2276, 32
      %vm2313 = vcmp.lt.s32.totalorder %v2277, 32
      %vm2314 = vcmp.lt.s32.totalorder %v2278, 32
      %vm2315 = vcmp.lt.s32.totalorder %v2279, 32
      %vm2316 = vcmp.lt.s32.totalorder %v2280, 32
      %vm2317 = vmand %vm2285, %vm2301
      %vm2318 = vmand %vm2286, %vm2302
      %vm2319 = vmand %vm2287, %vm2303
      %vm2320 = vmand %vm2288, %vm2304
      %vm2321 = vmand %vm2289, %vm2305
      %vm2322 = vmand %vm2290, %vm2306
      %vm2323 = vmand %vm2291, %vm2307
      %vm2324 = vmand %vm2292, %vm2308
      %vm2325 = vmand %vm2293, %vm2309
      %vm2326 = vmand %vm2294, %vm2310
      %vm2327 = vmand %vm2295, %vm2311
      %vm2328 = vmand %vm2296, %vm2312
      %vm2329 = vmand %vm2297, %vm2313
      %vm2330 = vmand %vm2298, %vm2314
      %vm2331 = vmand %vm2299, %vm2315
      %vm2332 = vmand %vm2300, %vm2316
      %vm2333 = vcmp.lt.s32.totalorder %v2284, 32
      %vm2334 = vmand %vm2317, %vm2333
      %vm2335 = vmand %vm2318, %vm2333
      %vm2336 = vmand %vm2319, %vm2333
      %vm2337 = vmand %vm2320, %vm2333
      %vm2338 = vmand %vm2321, %vm2333
      %vm2339 = vmand %vm2322, %vm2333
      %vm2340 = vmand %vm2323, %vm2333
      %vm2341 = vmand %vm2324, %vm2333
      %vm2342 = vmand %vm2325, %vm2333
      %vm2343 = vmand %vm2326, %vm2333
      %vm2344 = vmand %vm2327, %vm2333
      %vm2345 = vmand %vm2328, %vm2333
      %vm2346 = vmand %vm2329, %vm2333
      %vm2347 = vmand %vm2330, %vm2333
      %vm2348 = vmand %vm2331, %vm2333
      %vm2349 = vmand %vm2332, %vm2333
      %v2350 = vsel %vm2334, %v2216, 0.0
      %v2351 = vsel %vm2335, %v2217, 0.0
      %v2352 = vsel %vm2336, %v2218, 0.0
      %v2353 = vsel %vm2337, %v2219, 0.0
      %v2354 = vsel %vm2338, %v2220, 0.0
      %v2355 = vsel %vm2339, %v2221, 0.0
      %v2356 = vsel %vm2340, %v2222, 0.0
      %v2357 = vsel %vm2341, %v2223, 0.0
      %v2358 = vsel %vm2342, %v2224, 0.0
      %v2359 = vsel %vm2343, %v2225, 0.0
      %v2360 = vsel %vm2344, %v2226, 0.0
      %v2361 = vsel %vm2345, %v2227, 0.0
      %v2362 = vsel %vm2346, %v2228, 0.0
      %v2363 = vsel %vm2347, %v2229, 0.0
      %v2364 = vsel %vm2348, %v2230, 0.0
      %v2365 = vsel %vm2349, %v2231, 0.0
      %v2366 = vadd.f32 %v2350, %v2351
      %v2367 = vadd.f32 %v2366, %v2352
      %v2368 = vadd.f32 %v2367, %v2353
      %v2369 = vadd.f32 %v2368, %v2354
      %v2370 = vadd.f32 %v2369, %v2355
      %v2371 = vadd.f32 %v2370, %v2356
      %v2372 = vadd.f32 %v2371, %v2357
      %v2373 = vadd.f32 %v2372, %v2358
      %v2374 = vadd.f32 %v2373, %v2359
      %v2375 = vadd.f32 %v2374, %v2360
      %v2376 = vadd.f32 %v2375, %v2361
      %v2377 = vadd.f32 %v2376, %v2362
      %v2378 = vadd.f32 %v2377, %v2363
      %v2379 = vadd.f32 %v2378, %v2364
      %v2380 = vadd.f32 %v2379, %v2365
      %v2381 = vrot.slane %v2380, 4
      %v2382 = vadd.f32 %v2380, %v2381
      %v2383 = vrot.slane %v2382, 2
      %v2384 = vadd.f32 %v2382, %v2383
      %v2385 = vrot.slane %v2384, 1
      %v2386 = vadd.f32 %v2384, %v2385
      %v2387 = vld [vmem:[#allocation2] sm:$0x1]
      %v2388 = vadd.f32 %v2387, %v2386
      %2389 = vst [vmem:[#allocation2] sm:$0x1] %v2388
    $region57: #{tpu_custom_call.1} parent=1 // pred_fallthru
      _
    %p2390 = pneg %p2243
    // Predicated region
    $region58: #{tpu_custom_call.1} parent=1 // pred_check
      _
    $region59: #{tpu_custom_call.1} parent=1 // pred_check_branch
      %2392 = sbr.rel (%p2243) target = $region61
    $region60: #{tpu_custom_call.1} parent=1 // pred_region
      %v2393 = vadd.f32 %v2216, %v2217
      %v2394 = vadd.f32 %v2393, %v2218
      %v2395 = vadd.f32 %v2394, %v2219
      %v2396 = vadd.f32 %v2395, %v2220
      %v2397 = vadd.f32 %v2396, %v2221
      %v2398 = vadd.f32 %v2397, %v2222
      %v2399 = vadd.f32 %v2398, %v2223
      %v2400 = vadd.f32 %v2399, %v2224
      %v2401 = vadd.f32 %v2400, %v2225
      %v2402 = vadd.f32 %v2401, %v2226
      %v2403 = vadd.f32 %v2402, %v2227
      %v2404 = vadd.f32 %v2403, %v2228
      %v2405 = vadd.f32 %v2404, %v2229
      %v2406 = vadd.f32 %v2405, %v2230
      %v2407 = vadd.f32 %v2406, %v2231
      %v2408 = vrot.slane %v2407, 4
      %v2409 = vadd.f32 %v2407, %v2408
      %v2410 = vrot.slane %v2409, 2
      %v2411 = vadd.f32 %v2409, %v2410
      %v2412 = vrot.slane %v2411, 1
      %v2413 = vadd.f32 %v2411, %v2412
      %v2414 = vld [vmem:[#allocation2] sm:$0x1]
      %v2415 = vadd.f32 %v2414, %v2413
      %2416 = vst [vmem:[#allocation2] sm:$0x1] %v2415
    $region61: #{tpu_custom_call.1} parent=1 // pred_fallthru
      _
    // Predicated region
    $region62: #{tpu_custom_call.1} parent=1 // pred_check
      _
    $region63: #{tpu_custom_call.1} parent=1 // pred_check_branch
      %2418 = sbr.rel (0) target = $region65
    $region64: #{tpu_custom_call.1} parent=1 // pred_region
      %s2420 = ssub.s32 16, 16
      %2421 = vsyncadd [#allocation3], %s2420
      %s2423 = sshll.u32 [#allocation2], 4
      %s2424 = int_to_ptr.vmem [resolvable:$true] %s2423
      %2426 = dma.vmem_to_hbm [thread:$0]  %s2424, 16, %s12, [#allocation3]
    $region65: #{tpu_custom_call.1} parent=1 // pred_fallthru
      _
    // Predicated region
    $region66: #{tpu_custom_call.1} parent=1 // pred_check
      _
    $region67: #{tpu_custom_call.1} parent=1 // pred_check_branch
      %2428 = sbr.rel (0) target = $region69
    $region68: #{tpu_custom_call.1} parent=1 // pred_region
      %2429 = dma.done [#allocation3], 16
    $region69: #{tpu_custom_call.1} parent=1 // pred_fallthru
      _
    %2430 = vsyncpa [#allocation3], 1

</llo_original>
